<compile_context>
chip_gen: v7x
topology: tpu7x:2x2x1
jax: 0.10.0
libtpu: 0.0.40
codegen_flags: <defaults>
</compile_context>

<pallas_src>
import jax
import jax.numpy as jnp
from jax.experimental import pallas as pl
from jax.experimental.pallas import tpu as pltpu

# ---- Module-implied constants (clip.tokenize -> 77 tokens, ctx_dim=512) ----
CTX_DIM = 512
N_CTX = 4            # "X X X X" placeholder length in ctx_init
N_CLS_CTX = 4        # learnable class-context tokens
TOTAL_TOKENS = 77    # CLIP context length
N_PREFIX = N_CTX + 1                                 # 5  -> embedding[:, :5, :]
N_SUFFIX = TOTAL_TOKENS - (N_PREFIX + N_CLS_CTX)     # 68 -> embedding[:, 9:, :]

MAX_B_TILE = 32                      # ~9.6 MiB double-buffered f32 output/step
SMALL_BATCH_THRESHOLD = 16           # below this, pure-JAX path wins
CLS_TABLE_VMEM_BUDGET = 12 * 2**20   # resident-table path only if table fits


def _prompt_kernel_table(label_ref, prefix_ref, cls_ref, suffix_ref, out_ref):
    # label_ref : SMEM (b_pad,) int32       (scalar prefetch)
    # prefix_ref: VMEM (1, 5, D)            (constant block, single-buffered)
    # cls_ref   : VMEM (C, 4, D)            (whole table, single-buffered)
    # suffix_ref: VMEM (1, 68, D)           (constant block, single-buffered)
    # out_ref   : VMEM (b_tile, 77, D)
    b_tile = out_ref.shape[0]
    base = pl.program_id(0) * b_tile

    # Direct static-slice stores of each segment (no in-vreg concat of a
    # multi-MB block).
    out_ref[:, :N_PREFIX, :] = jnp.broadcast_to(
        prefix_ref[0], (b_tile, N_PREFIX, CTX_DIM))
    out_ref[:, N_PREFIX + N_CLS_CTX:, :] = jnp.broadcast_to(
        suffix_ref[0], (b_tile, N_SUFFIX, CTX_DIM))
    # Per-row gather from the resident table (unrolled scalar-indexed loads).
    for i in range(b_tile):
        out_ref[i, N_PREFIX:N_PREFIX + N_CLS_CTX, :] = (
            cls_ref[label_ref[base + i]])


def _prompt_kernel_pregathered(prefix_ref, cls_ref, suffix_ref, out_ref):
    # Same assembly, but cls rows were gathered in the wrapper and arrive as
    # a per-tile (b_tile, 4, D) block.
    b_tile = out_ref.shape[0]
    out_ref[:, :N_PREFIX, :] = jnp.broadcast_to(
        prefix_ref[0], (b_tile, N_PREFIX, CTX_DIM))
    out_ref[:, N_PREFIX:N_PREFIX + N_CLS_CTX, :] = cls_ref[...]
    out_ref[:, N_PREFIX + N_CLS_CTX:, :] = jnp.broadcast_to(
        suffix_ref[0], (b_tile, N_SUFFIX, CTX_DIM))


def _reference(label, token_prefix, cls_ctx, token_suffix):
    b = label.shape[0]
    prefix = jnp.broadcast_to(token_prefix, (b,) + token_prefix.shape[1:])
    suffix = jnp.broadcast_to(token_suffix, (b,) + token_suffix.shape[1:])
    return jnp.concatenate([prefix, cls_ctx[label], suffix], axis=1)


def _pick_b_tile(b, max_tile):
    """Prefer a tile that divides b (no padded tail -> no post-call slice)."""
    if b <= max_tile:
        return b
    for d in range(max_tile, max(max_tile // 4, 1) - 1, -1):
        if b % d == 0:
            return d
    return max_tile  # rare: no good divisor -> pad + slice tail


def prompt_learner_forward(label, token_prefix, cls_ctx, token_suffix,
                           *, max_b_tile=MAX_B_TILE,
                           cls_table_vmem_budget=CLS_TABLE_VMEM_BUDGET):
    """label: (b,) int; token_prefix: (1,5,D); cls_ctx: (C,4,D);
    token_suffix: (1,68,D)  ->  prompts: (b, 77, D).

    NOTE: out-of-range labels are clamped to [0, C) (PyTorch would raise).
    Output dtype follows the parameter dtype (use bf16 params downstream of a
    bf16 text encoder to halve HBM write traffic)."""
    b = int(label.shape[0])
    num_class = cls_ctx.shape[0]
    dtype = cls_ctx.dtype
    assert token_prefix.dtype == dtype and token_suffix.dtype == dtype, (
        "prefix/suffix/cls_ctx dtypes must match")
    assert token_prefix.shape == (1, N_PREFIX, CTX_DIM)
    assert token_suffix.shape == (1, N_SUFFIX, CTX_DIM)
    assert cls_ctx.shape[1:] == (N_CLS_CTX, CTX_DIM)

    label = jnp.clip(label.astype(jnp.int32), 0, num_class - 1)

    # Tiny batches: kernel launch + pipeline warm-up dominates; XLA's fused
    # gather/concat is as good or better.
    if b <= SMALL_BATCH_THRESHOLD:
        return _reference(label, token_prefix, cls_ctx, token_suffix)

    b_tile = _pick_b_tile(b, max(1, int(max_b_tile)))
    num_tiles = pl.cdiv(b, b_tile)
    b_pad = num_tiles * b_tile
    if b_pad != b:
        # Rare fallback (no divisor of b in [max_b_tile/4, max_b_tile]); tail
        # rows are computed with class-0 data and sliced off below.
        label = jnp.pad(label, (0, b_pad - b))

    isz = jnp.dtype(dtype).itemsize
    table_bytes = num_class * N_CLS_CTX * CTX_DIM * isz
    use_resident_table = table_bytes <= cls_table_vmem_budget

    # Per-step VMEM: double-buffered output + single-buffered constants
    # (+ resident table or double-buffered gathered cls block) + headroom.
    vmem_need = 2 * b_tile * TOTAL_TOKENS * CTX_DIM * isz
    vmem_need += (N_PREFIX + N_SUFFIX) * CTX_DIM * isz
    vmem_need += (table_bytes if use_resident_table
                  else 2 * b_tile * N_CLS_CTX * CTX_DIM * isz)
    vmem_limit = int(min(64 * 2**20, max(32 * 2**20, vmem_need + 8 * 2**20)))

    compiler_params = pltpu.CompilerParams(
        # Batch tiles are independent.
        # TODO(synk): on v7x verify both TensorCores are used; if not, switch
        # this axis to pltpu.CORE_PARALLEL or split work explicitly per core.
        dimension_semantics=("parallel",),
        vmem_limit_bytes=vmem_limit,
    )
    out_shape = jax.ShapeDtypeStruct((b_pad, TOTAL_TOKENS, CTX_DIM), dtype)

    if use_resident_table:
        grid_spec = pltpu.PrefetchScalarGridSpec(
            num_scalar_prefetch=1,
            grid=(num_tiles,),
            in_specs=[
                # prefix / cls table / suffix: constant block index -> fetched
                # once and kept single-buffered (no duplicated VMEM copy).
                pl.BlockSpec((1, N_PREFIX, CTX_DIM), lambda t, lbl: (0, 0, 0),
                             pipeline_mode=pl.Buffered(1)),
                pl.BlockSpec((num_class, N_CLS_CTX, CTX_DIM),
                             lambda t, lbl: (0, 0, 0),
                             pipeline_mode=pl.Buffered(1)),
                pl.BlockSpec((1, N_SUFFIX, CTX_DIM), lambda t, lbl: (0, 0, 0),
                             pipeline_mode=pl.Buffered(1)),
            ],
            out_specs=pl.BlockSpec((b_tile, TOTAL_TOKENS, CTX_DIM),
                                   lambda t, lbl: (t, 0, 0)),
        )
        out = pl.pallas_call(
            _prompt_kernel_table,
            out_shape=out_shape,
            grid_spec=grid_spec,
            compiler_params=compiler_params,
        )(label, token_prefix, cls_ctx, token_suffix)
    else:
        # Large-C fallback: the resident table would blow the VMEM budget, so
        # gather the needed rows with XLA and stream them per batch tile.
        cls_rows = jnp.take(cls_ctx, label, axis=0)          # (b_pad, 4, D)
        grid_spec = pltpu.PrefetchScalarGridSpec(
            num_scalar_prefetch=0,
            grid=(num_tiles,),
            in_specs=[
                pl.BlockSpec((1, N_PREFIX, CTX_DIM), lambda t: (0, 0, 0),
                             pipeline_mode=pl.Buffered(1)),
                pl.BlockSpec((b_tile, N_CLS_CTX, CTX_DIM), lambda t: (t, 0, 0)),
                pl.BlockSpec((1, N_SUFFIX, CTX_DIM), lambda t: (0, 0, 0),
                             pipeline_mode=pl.Buffered(1)),
            ],
            out_specs=pl.BlockSpec((b_tile, TOTAL_TOKENS, CTX_DIM),
                                   lambda t: (t, 0, 0)),
        )
        out = pl.pallas_call(
            _prompt_kernel_pregathered,
            out_shape=out_shape,
            grid_spec=grid_spec,
            compiler_params=compiler_params,
        )(token_prefix, cls_rows, token_suffix)

    return out[:b] if b_pad != b else out


if __name__ == "__main__":
    key = jax.random.PRNGKey(0)
    k_emb, k_cls, k_lbl = jax.random.split(key, 3)

    num_class = 10
    batch = 48          # > SMALL_BATCH_THRESHOLD -> Pallas path; b_tile=24, 2 tiles
    dtype = jnp.float32

    # Deterministic stand-in for token_embedding(clip.tokenize(ctx_init)):
    # TODO(synk): real CLIP token embedding not available in-script; synthesized.
    embedding = jax.random.normal(k_emb, (1, TOTAL_TOKENS, CTX_DIM), dtype=dtype)
    token_prefix = embedding[:, :N_PREFIX, :]                 # (1, 5, 512)
    token_suffix = embedding[:, N_PREFIX + N_CLS_CTX:, :]     # (1, 68, 512)

    # cls_vectors ~ N(0, 0.02), like nn.init.normal_(std=0.02)
    cls_ctx = 0.02 * jax.random.normal(
        k_cls, (num_class, N_CLS_CTX, CTX_DIM), dtype=dtype)

    label = jax.random.randint(k_lbl, (batch,), 0, num_class, dtype=jnp.int32)
    ref = _reference(label, token_prefix, cls_ctx, token_suffix)

    # 1) main path: resident cls table + in-kernel gather.
    prompts = jax.block_until_ready(
        prompt_learner_forward(label, token_prefix, cls_ctx, token_suffix))
    assert prompts.shape == (batch, TOTAL_TOKENS, CTX_DIM), prompts.shape
    assert prompts.dtype == dtype
    assert jnp.allclose(prompts, ref), "table-path mismatch vs reference"

    # 2) large-C fallback path (forced by a zero table budget).
    prompts2 = jax.block_until_ready(
        prompt_learner_forward(label, token_prefix, cls_ctx, token_suffix,
                               cls_table_vmem_budget=0))
    assert jnp.allclose(prompts2, ref), "pre-gathered-path mismatch vs reference"

    # 3) small-batch dispatch (pure JAX).
    small = prompt_learner_forward(label[:2], token_prefix, cls_ctx, token_suffix)
    assert jnp.allclose(small, ref[:2]), "small-batch path mismatch"

    print("KERNEL_OK")
</pallas_src>

<mosaic_0001>
module attributes {stable_mosaic.version = 11 : i64} {
  func.func @_prompt_kernel_table(%arg0: i32, %arg1: memref<48xi32, #tpu.memory_space<smem>>, %arg2: memref<1x5x512xf32, #tpu.memory_space<vmem>>, %arg3: memref<10x4x512xf32, #tpu.memory_space<vmem>>, %arg4: memref<1x68x512xf32, #tpu.memory_space<vmem>>, %arg5: memref<24x77x512xf32, #tpu.memory_space<vmem>>) attributes {dimension_semantics = [#tpu.dimension_semantics<parallel>], iteration_bounds = array<i64: 2>, scalar_prefetch = 1 : i64, scratch_operands = 0 : i64, tpu.core_type = #tpu.core_type<tc>, window_params = [{pipeline_mode = #tpu.pipeline_mode<synchronous>, transform_indices = @transform_0, window_bounds = array<i64: 1, 5, 512>}, {pipeline_mode = #tpu.pipeline_mode<synchronous>, transform_indices = @transform_1, window_bounds = array<i64: 10, 4, 512>}, {pipeline_mode = #tpu.pipeline_mode<synchronous>, transform_indices = @transform_2, window_bounds = array<i64: 1, 68, 512>}, {transform_indices = @transform_3, window_bounds = array<i64: 24, 77, 512>}]} {
    %c24_i32 = arith.constant 24 : i32
    %0 = arith.muli %arg0, %c24_i32 : i32
    %c0 = arith.constant 0 : index
    %c0_0 = arith.constant 0 : index
    %c0_1 = arith.constant 0 : index
    %1 = vector.load %arg2[%c0, %c0_0, %c0_1] : memref<1x5x512xf32, #tpu.memory_space<vmem>>, vector<1x5x512xf32>
    %2 = vector.shape_cast %1 : vector<1x5x512xf32> to vector<5x512xf32>
    %3 = vector.shape_cast %2 : vector<5x512xf32> to vector<1x5x512xf32>
    %4 = vector.broadcast %3 : vector<1x5x512xf32> to vector<24x5x512xf32>
    %c0_2 = arith.constant 0 : index
    %c0_3 = arith.constant 0 : index
    %c0_4 = arith.constant 0 : index
    %5 = vector.load %arg5[%c0_2, %c0_3, %c0_4] : memref<24x77x512xf32, #tpu.memory_space<vmem>>, vector<24x5x512xf32>
    tpu.vector_store %arg5[%c0_2, %c0_3, %c0_4], %4 {strides = array<i32>} : memref<24x77x512xf32, #tpu.memory_space<vmem>>, vector<24x5x512xf32>,
    %c0_5 = arith.constant 0 : index
    %c0_6 = arith.constant 0 : index
    %c0_7 = arith.constant 0 : index
    %6 = vector.load %arg4[%c0_5, %c0_6, %c0_7] : memref<1x68x512xf32, #tpu.memory_space<vmem>>, vector<1x68x512xf32>
    %7 = vector.shape_cast %6 : vector<1x68x512xf32> to vector<68x512xf32>
    %8 = vector.shape_cast %7 : vector<68x512xf32> to vector<1x68x512xf32>
    %9 = vector.broadcast %8 : vector<1x68x512xf32> to vector<24x68x512xf32>
    %c0_8 = arith.constant 0 : index
    %c9 = arith.constant 9 : index
    %c0_9 = arith.constant 0 : index
    %10 = vector.load %arg5[%c0_8, %c9, %c0_9] : memref<24x77x512xf32, #tpu.memory_space<vmem>>, vector<24x68x512xf32>
    tpu.vector_store %arg5[%c0_8, %c9, %c0_9], %9 {strides = array<i32>} : memref<24x77x512xf32, #tpu.memory_space<vmem>>, vector<24x68x512xf32>,
    %c0_i32 = arith.constant 0 : i32
    %11 = arith.addi %0, %c0_i32 : i32
    %12 = arith.index_cast %11 : i32 to index
    %13 = memref.load %arg1[%12] : memref<48xi32, #tpu.memory_space<smem>>
    %14 = arith.index_cast %13 : i32 to index
    %c0_10 = arith.constant 0 : index
    %c0_11 = arith.constant 0 : index
    %15 = vector.load %arg3[%14, %c0_10, %c0_11] : memref<10x4x512xf32, #tpu.memory_space<vmem>>, vector<1x4x512xf32>
    %16 = vector.shape_cast %15 : vector<1x4x512xf32> to vector<4x512xf32>
    %c0_12 = arith.constant 0 : index
    %c5 = arith.constant 5 : index
    %c0_13 = arith.constant 0 : index
    %17 = vector.load %arg5[%c0_12, %c5, %c0_13] : memref<24x77x512xf32, #tpu.memory_space<vmem>>, vector<1x4x512xf32>
    %18 = vector.shape_cast %17 : vector<1x4x512xf32> to vector<4x512xf32>
    %19 = vector.shape_cast %16 : vector<4x512xf32> to vector<1x4x512xf32>
    tpu.vector_store %arg5[%c0_12, %c5, %c0_13], %19 {strides = array<i32>} : memref<24x77x512xf32, #tpu.memory_space<vmem>>, vector<1x4x512xf32>,
    %c1_i32 = arith.constant 1 : i32
    %20 = arith.addi %0, %c1_i32 : i32
    %21 = arith.index_cast %20 : i32 to index
    %22 = memref.load %arg1[%21] : memref<48xi32, #tpu.memory_space<smem>>
    %23 = arith.index_cast %22 : i32 to index
    %c0_14 = arith.constant 0 : index
    %c0_15 = arith.constant 0 : index
    %24 = vector.load %arg3[%23, %c0_14, %c0_15] : memref<10x4x512xf32, #tpu.memory_space<vmem>>, vector<1x4x512xf32>
    %25 = vector.shape_cast %24 : vector<1x4x512xf32> to vector<4x512xf32>
    %c1 = arith.constant 1 : index
    %c5_16 = arith.constant 5 : index
    %c0_17 = arith.constant 0 : index
    %26 = vector.load %arg5[%c1, %c5_16, %c0_17] : memref<24x77x512xf32, #tpu.memory_space<vmem>>, vector<1x4x512xf32>
    %27 = vector.shape_cast %26 : vector<1x4x512xf32> to vector<4x512xf32>
    %28 = vector.shape_cast %25 : vector<4x512xf32> to vector<1x4x512xf32>
    tpu.vector_store %arg5[%c1, %c5_16, %c0_17], %28 {strides = array<i32>} : memref<24x77x512xf32, #tpu.memory_space<vmem>>, vector<1x4x512xf32>,
    %c2_i32 = arith.constant 2 : i32
    %29 = arith.addi %0, %c2_i32 : i32
    %30 = arith.index_cast %29 : i32 to index
    %31 = memref.load %arg1[%30] : memref<48xi32, #tpu.memory_space<smem>>
    %32 = arith.index_cast %31 : i32 to index
    %c0_18 = arith.constant 0 : index
    %c0_19 = arith.constant 0 : index
    %33 = vector.load %arg3[%32, %c0_18, %c0_19] : memref<10x4x512xf32, #tpu.memory_space<vmem>>, vector<1x4x512xf32>
    %34 = vector.shape_cast %33 : vector<1x4x512xf32> to vector<4x512xf32>
    %c2 = arith.constant 2 : index
    %c5_20 = arith.constant 5 : index
    %c0_21 = arith.constant 0 : index
    %35 = vector.load %arg5[%c2, %c5_20, %c0_21] : memref<24x77x512xf32, #tpu.memory_space<vmem>>, vector<1x4x512xf32>
    %36 = vector.shape_cast %35 : vector<1x4x512xf32> to vector<4x512xf32>
    %37 = vector.shape_cast %34 : vector<4x512xf32> to vector<1x4x512xf32>
    tpu.vector_store %arg5[%c2, %c5_20, %c0_21], %37 {strides = array<i32>} : memref<24x77x512xf32, #tpu.memory_space<vmem>>, vector<1x4x512xf32>,
    %c3_i32 = arith.constant 3 : i32
    %38 = arith.addi %0, %c3_i32 : i32
    %39 = arith.index_cast %38 : i32 to index
    %40 = memref.load %arg1[%39] : memref<48xi32, #tpu.memory_space<smem>>
    %41 = arith.index_cast %40 : i32 to index
    %c0_22 = arith.constant 0 : index
    %c0_23 = arith.constant 0 : index
    %42 = vector.load %arg3[%41, %c0_22, %c0_23] : memref<10x4x512xf32, #tpu.memory_space<vmem>>, vector<1x4x512xf32>
    %43 = vector.shape_cast %42 : vector<1x4x512xf32> to vector<4x512xf32>
    %c3 = arith.constant 3 : index
    %c5_24 = arith.constant 5 : index
    %c0_25 = arith.constant 0 : index
    %44 = vector.load %arg5[%c3, %c5_24, %c0_25] : memref<24x77x512xf32, #tpu.memory_space<vmem>>, vector<1x4x512xf32>
    %45 = vector.shape_cast %44 : vector<1x4x512xf32> to vector<4x512xf32>
    %46 = vector.shape_cast %43 : vector<4x512xf32> to vector<1x4x512xf32>
    tpu.vector_store %arg5[%c3, %c5_24, %c0_25], %46 {strides = array<i32>} : memref<24x77x512xf32, #tpu.memory_space<vmem>>, vector<1x4x512xf32>,
    %c4_i32 = arith.constant 4 : i32
    %47 = arith.addi %0, %c4_i32 : i32
    %48 = arith.index_cast %47 : i32 to index
    %49 = memref.load %arg1[%48] : memref<48xi32, #tpu.memory_space<smem>>
    %50 = arith.index_cast %49 : i32 to index
    %c0_26 = arith.constant 0 : index
    %c0_27 = arith.constant 0 : index
    %51 = vector.load %arg3[%50, %c0_26, %c0_27] : memref<10x4x512xf32, #tpu.memory_space<vmem>>, vector<1x4x512xf32>
    %52 = vector.shape_cast %51 : vector<1x4x512xf32> to vector<4x512xf32>
    %c4 = arith.constant 4 : index
    %c5_28 = arith.constant 5 : index
    %c0_29 = arith.constant 0 : index
    %53 = vector.load %arg5[%c4, %c5_28, %c0_29] : memref<24x77x512xf32, #tpu.memory_space<vmem>>, vector<1x4x512xf32>
    %54 = vector.shape_cast %53 : vector<1x4x512xf32> to vector<4x512xf32>
    %55 = vector.shape_cast %52 : vector<4x512xf32> to vector<1x4x512xf32>
    tpu.vector_store %arg5[%c4, %c5_28, %c0_29], %55 {strides = array<i32>} : memref<24x77x512xf32, #tpu.memory_space<vmem>>, vector<1x4x512xf32>,
    %c5_i32 = arith.constant 5 : i32
    %56 = arith.addi %0, %c5_i32 : i32
    %57 = arith.index_cast %56 : i32 to index
    %58 = memref.load %arg1[%57] : memref<48xi32, #tpu.memory_space<smem>>
    %59 = arith.index_cast %58 : i32 to index
    %c0_30 = arith.constant 0 : index
    %c0_31 = arith.constant 0 : index
    %60 = vector.load %arg3[%59, %c0_30, %c0_31] : memref<10x4x512xf32, #tpu.memory_space<vmem>>, vector<1x4x512xf32>
    %61 = vector.shape_cast %60 : vector<1x4x512xf32> to vector<4x512xf32>
    %c5_32 = arith.constant 5 : index
    %c5_33 = arith.constant 5 : index
    %c0_34 = arith.constant 0 : index
    %62 = vector.load %arg5[%c5_32, %c5_33, %c0_34] : memref<24x77x512xf32, #tpu.memory_space<vmem>>, vector<1x4x512xf32>
    %63 = vector.shape_cast %62 : vector<1x4x512xf32> to vector<4x512xf32>
    %64 = vector.shape_cast %61 : vector<4x512xf32> to vector<1x4x512xf32>
    tpu.vector_store %arg5[%c5_32, %c5_33, %c0_34], %64 {strides = array<i32>} : memref<24x77x512xf32, #tpu.memory_space<vmem>>, vector<1x4x512xf32>,
    %c6_i32 = arith.constant 6 : i32
    %65 = arith.addi %0, %c6_i32 : i32
    %66 = arith.index_cast %65 : i32 to index
    %67 = memref.load %arg1[%66] : memref<48xi32, #tpu.memory_space<smem>>
    %68 = arith.index_cast %67 : i32 to index
    %c0_35 = arith.constant 0 : index
    %c0_36 = arith.constant 0 : index
    %69 = vector.load %arg3[%68, %c0_35, %c0_36] : memref<10x4x512xf32, #tpu.memory_space<vmem>>, vector<1x4x512xf32>
    %70 = vector.shape_cast %69 : vector<1x4x512xf32> to vector<4x512xf32>
    %c6 = arith.constant 6 : index
    %c5_37 = arith.constant 5 : index
    %c0_38 = arith.constant 0 : index
    %71 = vector.load %arg5[%c6, %c5_37, %c0_38] : memref<24x77x512xf32, #tpu.memory_space<vmem>>, vector<1x4x512xf32>
    %72 = vector.shape_cast %71 : vector<1x4x512xf32> to vector<4x512xf32>
    %73 = vector.shape_cast %70 : vector<4x512xf32> to vector<1x4x512xf32>
    tpu.vector_store %arg5[%c6, %c5_37, %c0_38], %73 {strides = array<i32>} : memref<24x77x512xf32, #tpu.memory_space<vmem>>, vector<1x4x512xf32>,
    %c7_i32 = arith.constant 7 : i32
    %74 = arith.addi %0, %c7_i32 : i32
    %75 = arith.index_cast %74 : i32 to index
    %76 = memref.load %arg1[%75] : memref<48xi32, #tpu.memory_space<smem>>
    %77 = arith.index_cast %76 : i32 to index
    %c0_39 = arith.constant 0 : index
    %c0_40 = arith.constant 0 : index
    %78 = vector.load %arg3[%77, %c0_39, %c0_40] : memref<10x4x512xf32, #tpu.memory_space<vmem>>, vector<1x4x512xf32>
    %79 = vector.shape_cast %78 : vector<1x4x512xf32> to vector<4x512xf32>
    %c7 = arith.constant 7 : index
    %c5_41 = arith.constant 5 : index
    %c0_42 = arith.constant 0 : index
    %80 = vector.load %arg5[%c7, %c5_41, %c0_42] : memref<24x77x512xf32, #tpu.memory_space<vmem>>, vector<1x4x512xf32>
    %81 = vector.shape_cast %80 : vector<1x4x512xf32> to vector<4x512xf32>
    %82 = vector.shape_cast %79 : vector<4x512xf32> to vector<1x4x512xf32>
    tpu.vector_store %arg5[%c7, %c5_41, %c0_42], %82 {strides = array<i32>} : memref<24x77x512xf32, #tpu.memory_space<vmem>>, vector<1x4x512xf32>,
    %c8_i32 = arith.constant 8 : i32
    %83 = arith.addi %0, %c8_i32 : i32
    %84 = arith.index_cast %83 : i32 to index
    %85 = memref.load %arg1[%84] : memref<48xi32, #tpu.memory_space<smem>>
    %86 = arith.index_cast %85 : i32 to index
    %c0_43 = arith.constant 0 : index
    %c0_44 = arith.constant 0 : index
    %87 = vector.load %arg3[%86, %c0_43, %c0_44] : memref<10x4x512xf32, #tpu.memory_space<vmem>>, vector<1x4x512xf32>
    %88 = vector.shape_cast %87 : vector<1x4x512xf32> to vector<4x512xf32>
    %c8 = arith.constant 8 : index
    %c5_45 = arith.constant 5 : index
    %c0_46 = arith.constant 0 : index
    %89 = vector.load %arg5[%c8, %c5_45, %c0_46] : memref<24x77x512xf32, #tpu.memory_space<vmem>>, vector<1x4x512xf32>
    %90 = vector.shape_cast %89 : vector<1x4x512xf32> to vector<4x512xf32>
    %91 = vector.shape_cast %88 : vector<4x512xf32> to vector<1x4x512xf32>
    tpu.vector_store %arg5[%c8, %c5_45, %c0_46], %91 {strides = array<i32>} : memref<24x77x512xf32, #tpu.memory_space<vmem>>, vector<1x4x512xf32>,
    %c9_i32 = arith.constant 9 : i32
    %92 = arith.addi %0, %c9_i32 : i32
    %93 = arith.index_cast %92 : i32 to index
    %94 = memref.load %arg1[%93] : memref<48xi32, #tpu.memory_space<smem>>
    %95 = arith.index_cast %94 : i32 to index
    %c0_47 = arith.constant 0 : index
    %c0_48 = arith.constant 0 : index
    %96 = vector.load %arg3[%95, %c0_47, %c0_48] : memref<10x4x512xf32, #tpu.memory_space<vmem>>, vector<1x4x512xf32>
    %97 = vector.shape_cast %96 : vector<1x4x512xf32> to vector<4x512xf32>
    %c9_49 = arith.constant 9 : index
    %c5_50 = arith.constant 5 : index
    %c0_51 = arith.constant 0 : index
    %98 = vector.load %arg5[%c9_49, %c5_50, %c0_51] : memref<24x77x512xf32, #tpu.memory_space<vmem>>, vector<1x4x512xf32>
    %99 = vector.shape_cast %98 : vector<1x4x512xf32> to vector<4x512xf32>
    %100 = vector.shape_cast %97 : vector<4x512xf32> to vector<1x4x512xf32>
    tpu.vector_store %arg5[%c9_49, %c5_50, %c0_51], %100 {strides = array<i32>} : memref<24x77x512xf32, #tpu.memory_space<vmem>>, vector<1x4x512xf32>,
    %c10_i32 = arith.constant 10 : i32
    %101 = arith.addi %0, %c10_i32 : i32
    %102 = arith.index_cast %101 : i32 to index
    %103 = memref.load %arg1[%102] : memref<48xi32, #tpu.memory_space<smem>>
    %104 = arith.index_cast %103 : i32 to index
    %c0_52 = arith.constant 0 : index
    %c0_53 = arith.constant 0 : index
    %105 = vector.load %arg3[%104, %c0_52, %c0_53] : memref<10x4x512xf32, #tpu.memory_space<vmem>>, vector<1x4x512xf32>
    %106 = vector.shape_cast %105 : vector<1x4x512xf32> to vector<4x512xf32>
    %c10 = arith.constant 10 : index
    %c5_54 = arith.constant 5 : index
    %c0_55 = arith.constant 0 : index
    %107 = vector.load %arg5[%c10, %c5_54, %c0_55] : memref<24x77x512xf32, #tpu.memory_space<vmem>>, vector<1x4x512xf32>
    %108 = vector.shape_cast %107 : vector<1x4x512xf32> to vector<4x512xf32>
    %109 = vector.shape_cast %106 : vector<4x512xf32> to vector<1x4x512xf32>
    tpu.vector_store %arg5[%c10, %c5_54, %c0_55], %109 {strides = array<i32>} : memref<24x77x512xf32, #tpu.memory_space<vmem>>, vector<1x4x512xf32>,
    %c11_i32 = arith.constant 11 : i32
    %110 = arith.addi %0, %c11_i32 : i32
    %111 = arith.index_cast %110 : i32 to index
    %112 = memref.load %arg1[%111] : memref<48xi32, #tpu.memory_space<smem>>
    %113 = arith.index_cast %112 : i32 to index
    %c0_56 = arith.constant 0 : index
    %c0_57 = arith.constant 0 : index
    %114 = vector.load %arg3[%113, %c0_56, %c0_57] : memref<10x4x512xf32, #tpu.memory_space<vmem>>, vector<1x4x512xf32>
    %115 = vector.shape_cast %114 : vector<1x4x512xf32> to vector<4x512xf32>
    %c11 = arith.constant 11 : index
    %c5_58 = arith.constant 5 : index
    %c0_59 = arith.constant 0 : index
    %116 = vector.load %arg5[%c11, %c5_58, %c0_59] : memref<24x77x512xf32, #tpu.memory_space<vmem>>, vector<1x4x512xf32>
    %117 = vector.shape_cast %116 : vector<1x4x512xf32> to vector<4x512xf32>
    %118 = vector.shape_cast %115 : vector<4x512xf32> to vector<1x4x512xf32>
    tpu.vector_store %arg5[%c11, %c5_58, %c0_59], %118 {strides = array<i32>} : memref<24x77x512xf32, #tpu.memory_space<vmem>>, vector<1x4x512xf32>,
    %c12_i32 = arith.constant 12 : i32
    %119 = arith.addi %0, %c12_i32 : i32
    %120 = arith.index_cast %119 : i32 to index
    %121 = memref.load %arg1[%120] : memref<48xi32, #tpu.memory_space<smem>>
    %122 = arith.index_cast %121 : i32 to index
    %c0_60 = arith.constant 0 : index
    %c0_61 = arith.constant 0 : index
    %123 = vector.load %arg3[%122, %c0_60, %c0_61] : memref<10x4x512xf32, #tpu.memory_space<vmem>>, vector<1x4x512xf32>
    %124 = vector.shape_cast %123 : vector<1x4x512xf32> to vector<4x512xf32>
    %c12 = arith.constant 12 : index
    %c5_62 = arith.constant 5 : index
    %c0_63 = arith.constant 0 : index
    %125 = vector.load %arg5[%c12, %c5_62, %c0_63] : memref<24x77x512xf32, #tpu.memory_space<vmem>>, vector<1x4x512xf32>
    %126 = vector.shape_cast %125 : vector<1x4x512xf32> to vector<4x512xf32>
    %127 = vector.shape_cast %124 : vector<4x512xf32> to vector<1x4x512xf32>
    tpu.vector_store %arg5[%c12, %c5_62, %c0_63], %127 {strides = array<i32>} : memref<24x77x512xf32, #tpu.memory_space<vmem>>, vector<1x4x512xf32>,
    %c13_i32 = arith.constant 13 : i32
    %128 = arith.addi %0, %c13_i32 : i32
    %129 = arith.index_cast %128 : i32 to index
    %130 = memref.load %arg1[%129] : memref<48xi32, #tpu.memory_space<smem>>
    %131 = arith.index_cast %130 : i32 to index
    %c0_64 = arith.constant 0 : index
    %c0_65 = arith.constant 0 : index
    %132 = vector.load %arg3[%131, %c0_64, %c0_65] : memref<10x4x512xf32, #tpu.memory_space<vmem>>, vector<1x4x512xf32>
    %133 = vector.shape_cast %132 : vector<1x4x512xf32> to vector<4x512xf32>
    %c13 = arith.constant 13 : index
    %c5_66 = arith.constant 5 : index
    %c0_67 = arith.constant 0 : index
    %134 = vector.load %arg5[%c13, %c5_66, %c0_67] : memref<24x77x512xf32, #tpu.memory_space<vmem>>, vector<1x4x512xf32>
    %135 = vector.shape_cast %134 : vector<1x4x512xf32> to vector<4x512xf32>
    %136 = vector.shape_cast %133 : vector<4x512xf32> to vector<1x4x512xf32>
    tpu.vector_store %arg5[%c13, %c5_66, %c0_67], %136 {strides = array<i32>} : memref<24x77x512xf32, #tpu.memory_space<vmem>>, vector<1x4x512xf32>,
    %c14_i32 = arith.constant 14 : i32
    %137 = arith.addi %0, %c14_i32 : i32
    %138 = arith.index_cast %137 : i32 to index
    %139 = memref.load %arg1[%138] : memref<48xi32, #tpu.memory_space<smem>>
    %140 = arith.index_cast %139 : i32 to index
    %c0_68 = arith.constant 0 : index
    %c0_69 = arith.constant 0 : index
    %141 = vector.load %arg3[%140, %c0_68, %c0_69] : memref<10x4x512xf32, #tpu.memory_space<vmem>>, vector<1x4x512xf32>
    %142 = vector.shape_cast %141 : vector<1x4x512xf32> to vector<4x512xf32>
    %c14 = arith.constant 14 : index
    %c5_70 = arith.constant 5 : index
    %c0_71 = arith.constant 0 : index
    %143 = vector.load %arg5[%c14, %c5_70, %c0_71] : memref<24x77x512xf32, #tpu.memory_space<vmem>>, vector<1x4x512xf32>
    %144 = vector.shape_cast %143 : vector<1x4x512xf32> to vector<4x512xf32>
    %145 = vector.shape_cast %142 : vector<4x512xf32> to vector<1x4x512xf32>
    tpu.vector_store %arg5[%c14, %c5_70, %c0_71], %145 {strides = array<i32>} : memref<24x77x512xf32, #tpu.memory_space<vmem>>, vector<1x4x512xf32>,
    %c15_i32 = arith.constant 15 : i32
    %146 = arith.addi %0, %c15_i32 : i32
    %147 = arith.index_cast %146 : i32 to index
    %148 = memref.load %arg1[%147] : memref<48xi32, #tpu.memory_space<smem>>
    %149 = arith.index_cast %148 : i32 to index
    %c0_72 = arith.constant 0 : index
    %c0_73 = arith.constant 0 : index
    %150 = vector.load %arg3[%149, %c0_72, %c0_73] : memref<10x4x512xf32, #tpu.memory_space<vmem>>, vector<1x4x512xf32>
    %151 = vector.shape_cast %150 : vector<1x4x512xf32> to vector<4x512xf32>
    %c15 = arith.constant 15 : index
    %c5_74 = arith.constant 5 : index
    %c0_75 = arith.constant 0 : index
    %152 = vector.load %arg5[%c15, %c5_74, %c0_75] : memref<24x77x512xf32, #tpu.memory_space<vmem>>, vector<1x4x512xf32>
    %153 = vector.shape_cast %152 : vector<1x4x512xf32> to vector<4x512xf32>
    %154 = vector.shape_cast %151 : vector<4x512xf32> to vector<1x4x512xf32>
    tpu.vector_store %arg5[%c15, %c5_74, %c0_75], %154 {strides = array<i32>} : memref<24x77x512xf32, #tpu.memory_space<vmem>>, vector<1x4x512xf32>,
    %c16_i32 = arith.constant 16 : i32
    %155 = arith.addi %0, %c16_i32 : i32
    %156 = arith.index_cast %155 : i32 to index
    %157 = memref.load %arg1[%156] : memref<48xi32, #tpu.memory_space<smem>>
    %158 = arith.index_cast %157 : i32 to index
    %c0_76 = arith.constant 0 : index
    %c0_77 = arith.constant 0 : index
    %159 = vector.load %arg3[%158, %c0_76, %c0_77] : memref<10x4x512xf32, #tpu.memory_space<vmem>>, vector<1x4x512xf32>
    %160 = vector.shape_cast %159 : vector<1x4x512xf32> to vector<4x512xf32>
    %c16 = arith.constant 16 : index
    %c5_78 = arith.constant 5 : index
    %c0_79 = arith.constant 0 : index
    %161 = vector.load %arg5[%c16, %c5_78, %c0_79] : memref<24x77x512xf32, #tpu.memory_space<vmem>>, vector<1x4x512xf32>
    %162 = vector.shape_cast %161 : vector<1x4x512xf32> to vector<4x512xf32>
    %163 = vector.shape_cast %160 : vector<4x512xf32> to vector<1x4x512xf32>
    tpu.vector_store %arg5[%c16, %c5_78, %c0_79], %163 {strides = array<i32>} : memref<24x77x512xf32, #tpu.memory_space<vmem>>, vector<1x4x512xf32>,
    %c17_i32 = arith.constant 17 : i32
    %164 = arith.addi %0, %c17_i32 : i32
    %165 = arith.index_cast %164 : i32 to index
    %166 = memref.load %arg1[%165] : memref<48xi32, #tpu.memory_space<smem>>
    %167 = arith.index_cast %166 : i32 to index
    %c0_80 = arith.constant 0 : index
    %c0_81 = arith.constant 0 : index
    %168 = vector.load %arg3[%167, %c0_80, %c0_81] : memref<10x4x512xf32, #tpu.memory_space<vmem>>, vector<1x4x512xf32>
    %169 = vector.shape_cast %168 : vector<1x4x512xf32> to vector<4x512xf32>
    %c17 = arith.constant 17 : index
    %c5_82 = arith.constant 5 : index
    %c0_83 = arith.constant 0 : index
    %170 = vector.load %arg5[%c17, %c5_82, %c0_83] : memref<24x77x512xf32, #tpu.memory_space<vmem>>, vector<1x4x512xf32>
    %171 = vector.shape_cast %170 : vector<1x4x512xf32> to vector<4x512xf32>
    %172 = vector.shape_cast %169 : vector<4x512xf32> to vector<1x4x512xf32>
    tpu.vector_store %arg5[%c17, %c5_82, %c0_83], %172 {strides = array<i32>} : memref<24x77x512xf32, #tpu.memory_space<vmem>>, vector<1x4x512xf32>,
    %c18_i32 = arith.constant 18 : i32
    %173 = arith.addi %0, %c18_i32 : i32
    %174 = arith.index_cast %173 : i32 to index
    %175 = memref.load %arg1[%174] : memref<48xi32, #tpu.memory_space<smem>>
    %176 = arith.index_cast %175 : i32 to index
    %c0_84 = arith.constant 0 : index
    %c0_85 = arith.constant 0 : index
    %177 = vector.load %arg3[%176, %c0_84, %c0_85] : memref<10x4x512xf32, #tpu.memory_space<vmem>>, vector<1x4x512xf32>
    %178 = vector.shape_cast %177 : vector<1x4x512xf32> to vector<4x512xf32>
    %c18 = arith.constant 18 : index
    %c5_86 = arith.constant 5 : index
    %c0_87 = arith.constant 0 : index
    %179 = vector.load %arg5[%c18, %c5_86, %c0_87] : memref<24x77x512xf32, #tpu.memory_space<vmem>>, vector<1x4x512xf32>
    %180 = vector.shape_cast %179 : vector<1x4x512xf32> to vector<4x512xf32>
    %181 = vector.shape_cast %178 : vector<4x512xf32> to vector<1x4x512xf32>
    tpu.vector_store %arg5[%c18, %c5_86, %c0_87], %181 {strides = array<i32>} : memref<24x77x512xf32, #tpu.memory_space<vmem>>, vector<1x4x512xf32>,
    %c19_i32 = arith.constant 19 : i32
    %182 = arith.addi %0, %c19_i32 : i32
    %183 = arith.index_cast %182 : i32 to index
    %184 = memref.load %arg1[%183] : memref<48xi32, #tpu.memory_space<smem>>
    %185 = arith.index_cast %184 : i32 to index
    %c0_88 = arith.constant 0 : index
    %c0_89 = arith.constant 0 : index
    %186 = vector.load %arg3[%185, %c0_88, %c0_89] : memref<10x4x512xf32, #tpu.memory_space<vmem>>, vector<1x4x512xf32>
    %187 = vector.shape_cast %186 : vector<1x4x512xf32> to vector<4x512xf32>
    %c19 = arith.constant 19 : index
    %c5_90 = arith.constant 5 : index
    %c0_91 = arith.constant 0 : index
    %188 = vector.load %arg5[%c19, %c5_90, %c0_91] : memref<24x77x512xf32, #tpu.memory_space<vmem>>, vector<1x4x512xf32>
    %189 = vector.shape_cast %188 : vector<1x4x512xf32> to vector<4x512xf32>
    %190 = vector.shape_cast %187 : vector<4x512xf32> to vector<1x4x512xf32>
    tpu.vector_store %arg5[%c19, %c5_90, %c0_91], %190 {strides = array<i32>} : memref<24x77x512xf32, #tpu.memory_space<vmem>>, vector<1x4x512xf32>,
    %c20_i32 = arith.constant 20 : i32
    %191 = arith.addi %0, %c20_i32 : i32
    %192 = arith.index_cast %191 : i32 to index
    %193 = memref.load %arg1[%192] : memref<48xi32, #tpu.memory_space<smem>>
    %194 = arith.index_cast %193 : i32 to index
    %c0_92 = arith.constant 0 : index
    %c0_93 = arith.constant 0 : index
    %195 = vector.load %arg3[%194, %c0_92, %c0_93] : memref<10x4x512xf32, #tpu.memory_space<vmem>>, vector<1x4x512xf32>
    %196 = vector.shape_cast %195 : vector<1x4x512xf32> to vector<4x512xf32>
    %c20 = arith.constant 20 : index
    %c5_94 = arith.constant 5 : index
    %c0_95 = arith.constant 0 : index
    %197 = vector.load %arg5[%c20, %c5_94, %c0_95] : memref<24x77x512xf32, #tpu.memory_space<vmem>>, vector<1x4x512xf32>
    %198 = vector.shape_cast %197 : vector<1x4x512xf32> to vector<4x512xf32>
    %199 = vector.shape_cast %196 : vector<4x512xf32> to vector<1x4x512xf32>
    tpu.vector_store %arg5[%c20, %c5_94, %c0_95], %199 {strides = array<i32>} : memref<24x77x512xf32, #tpu.memory_space<vmem>>, vector<1x4x512xf32>,
    %c21_i32 = arith.constant 21 : i32
    %200 = arith.addi %0, %c21_i32 : i32
    %201 = arith.index_cast %200 : i32 to index
    %202 = memref.load %arg1[%201] : memref<48xi32, #tpu.memory_space<smem>>
    %203 = arith.index_cast %202 : i32 to index
    %c0_96 = arith.constant 0 : index
    %c0_97 = arith.constant 0 : index
    %204 = vector.load %arg3[%203, %c0_96, %c0_97] : memref<10x4x512xf32, #tpu.memory_space<vmem>>, vector<1x4x512xf32>
    %205 = vector.shape_cast %204 : vector<1x4x512xf32> to vector<4x512xf32>
    %c21 = arith.constant 21 : index
    %c5_98 = arith.constant 5 : index
    %c0_99 = arith.constant 0 : index
    %206 = vector.load %arg5[%c21, %c5_98, %c0_99] : memref<24x77x512xf32, #tpu.memory_space<vmem>>, vector<1x4x512xf32>
    %207 = vector.shape_cast %206 : vector<1x4x512xf32> to vector<4x512xf32>
    %208 = vector.shape_cast %205 : vector<4x512xf32> to vector<1x4x512xf32>
    tpu.vector_store %arg5[%c21, %c5_98, %c0_99], %208 {strides = array<i32>} : memref<24x77x512xf32, #tpu.memory_space<vmem>>, vector<1x4x512xf32>,
    %c22_i32 = arith.constant 22 : i32
    %209 = arith.addi %0, %c22_i32 : i32
    %210 = arith.index_cast %209 : i32 to index
    %211 = memref.load %arg1[%210] : memref<48xi32, #tpu.memory_space<smem>>
    %212 = arith.index_cast %211 : i32 to index
    %c0_100 = arith.constant 0 : index
    %c0_101 = arith.constant 0 : index
    %213 = vector.load %arg3[%212, %c0_100, %c0_101] : memref<10x4x512xf32, #tpu.memory_space<vmem>>, vector<1x4x512xf32>
    %214 = vector.shape_cast %213 : vector<1x4x512xf32> to vector<4x512xf32>
    %c22 = arith.constant 22 : index
    %c5_102 = arith.constant 5 : index
    %c0_103 = arith.constant 0 : index
    %215 = vector.load %arg5[%c22, %c5_102, %c0_103] : memref<24x77x512xf32, #tpu.memory_space<vmem>>, vector<1x4x512xf32>
    %216 = vector.shape_cast %215 : vector<1x4x512xf32> to vector<4x512xf32>
    %217 = vector.shape_cast %214 : vector<4x512xf32> to vector<1x4x512xf32>
    tpu.vector_store %arg5[%c22, %c5_102, %c0_103], %217 {strides = array<i32>} : memref<24x77x512xf32, #tpu.memory_space<vmem>>, vector<1x4x512xf32>,
    %c23_i32 = arith.constant 23 : i32
    %218 = arith.addi %0, %c23_i32 : i32
    %219 = arith.index_cast %218 : i32 to index
    %220 = memref.load %arg1[%219] : memref<48xi32, #tpu.memory_space<smem>>
    %221 = arith.index_cast %220 : i32 to index
    %c0_104 = arith.constant 0 : index
    %c0_105 = arith.constant 0 : index
    %222 = vector.load %arg3[%221, %c0_104, %c0_105] : memref<10x4x512xf32, #tpu.memory_space<vmem>>, vector<1x4x512xf32>
    %223 = vector.shape_cast %222 : vector<1x4x512xf32> to vector<4x512xf32>
    %c23 = arith.constant 23 : index
    %c5_106 = arith.constant 5 : index
    %c0_107 = arith.constant 0 : index
    %224 = vector.load %arg5[%c23, %c5_106, %c0_107] : memref<24x77x512xf32, #tpu.memory_space<vmem>>, vector<1x4x512xf32>
    %225 = vector.shape_cast %224 : vector<1x4x512xf32> to vector<4x512xf32>
    %226 = vector.shape_cast %223 : vector<4x512xf32> to vector<1x4x512xf32>
    tpu.vector_store %arg5[%c23, %c5_106, %c0_107], %226 {strides = array<i32>} : memref<24x77x512xf32, #tpu.memory_space<vmem>>, vector<1x4x512xf32>,
    return
  }
  func.func @transform_0(%arg0: i32, %arg1: memref<48xi32, #tpu.memory_space<smem>>) -> (i32, i32, i32) {
    %c0_i32 = arith.constant 0 : i32
    %c0_i32_0 = arith.constant 0 : i32
    %c0_i32_1 = arith.constant 0 : i32
    %c0_i32_2 = arith.constant 0 : i32
    return %c0_i32, %c0_i32_0, %c0_i32_1 : i32, i32, i32
  }
  func.func @transform_1(%arg0: i32, %arg1: memref<48xi32, #tpu.memory_space<smem>>) -> (i32, i32, i32) {
    %c0_i32 = arith.constant 0 : i32
    %c0_i32_0 = arith.constant 0 : i32
    %c0_i32_1 = arith.constant 0 : i32
    %c0_i32_2 = arith.constant 0 : i32
    return %c0_i32, %c0_i32_0, %c0_i32_1 : i32, i32, i32
  }
  func.func @transform_2(%arg0: i32, %arg1: memref<48xi32, #tpu.memory_space<smem>>) -> (i32, i32, i32) {
    %c0_i32 = arith.constant 0 : i32
    %c0_i32_0 = arith.constant 0 : i32
    %c0_i32_1 = arith.constant 0 : i32
    %c0_i32_2 = arith.constant 0 : i32
    return %c0_i32, %c0_i32_0, %c0_i32_1 : i32, i32, i32
  }
  func.func @transform_3(%arg0: i32, %arg1: memref<48xi32, #tpu.memory_space<smem>>) -> (i32, i32, i32) {
    %c0_i32 = arith.constant 0 : i32
    %c0_i32_0 = arith.constant 0 : i32
    %c0_i32_1 = arith.constant 0 : i32
    return %arg0, %c0_i32, %c0_i32_0 : i32, i32, i32
  }
}

</mosaic_0001>

<llo_original>
// kernel: tpu_custom_call.1
$region0: #{tpu_custom_call.1}
  #allocation0 [shape = 'u32[]', space=smem, size = 0x4, offset = 0x4, fixed_abs, tag = 'smem constant byte address 0x4 - core index']
  #allocation1 [shape = 'u32[144,128]{1,0:T(1,128)}', space=vmem, size = 0x12000, scoped, tag = 'internal scratch']
  #allocation2 [shape = 's32[1]{0}', space=sflag, size = 0x4, scoped, tag = 'scoped memory for tpu_custom_call.1']
  #allocation3 [shape = 'u8[512]{0}', space=smem, size = 0x200, scoped, tag = 'prefetched SMEM operand 0']
  %s0 = inlined_call_operand.hbm [shape: s32[48], index: 0, kind: input, shape index: {}]
  %s1 = inlined_call_operand.vmem [shape: f32[1,5,512], index: 1, kind: input, shape index: {}]
  %s2 = inlined_call_operand.hbm [shape: f32[10,4,512], index: 2, kind: input, shape index: {}]
  %s3 = inlined_call_operand.vmem [shape: f32[1,68,512], index: 3, kind: input, shape index: {}]
  %s4 = inlined_call_operand.vmem [shape: f32[48,77,512], index: 4, kind: output, shape index: {}]
  %s5 = sld [smem:[#allocation0]]
  $region49: #{tpu_custom_call.1} parent=0
    _
  %s7 = ssub.s32 1, %s5
  %s8 = scalar_select 0, %s7, %s5
  %10 = dma.hbm_to_smem %s0, 16, [#allocation3], [#allocation2]
  %11 = dma.done [#allocation2], 16
  %12 = sfence
  $region1: #{tpu_custom_call.1} parent=0
    #allocation4 [shape = 'u8[81920]{0}', space=vmem, size = 0x14000, scoped, tag = 'input window, operand 2, single buffered']
    #allocation5 [shape = 's32[2]{0}', space=sflag, size = 0x8, scoped, tag = 'scoped memory for tpu_custom_call.1']
    %13 = vsyncpa [#allocation5], 0
    loop: start=0, step=1, limit=4
    $region2: #{tpu_custom_call.1} parent=1 // loop_pre_header
      _
    $region3: #{tpu_custom_call.1} parent=1 // loop_header
      %s15 = sphi 0, %s19
      %p16 = scmp.ge.s32.totalorder %s15, 4
      %s23 = sphi 0, %s23
      %s25 = sphi 0, %s23
      %s26 = sphi 0, %s25
      %s40 = sphi 0, %s26
      %s44 = sphi 0, %s44
      %s46 = sphi 0, %s44
      %s47 = sphi 0, %s46
      %s61 = sphi 0, %s47
      %s65 = sphi 0, %s65
      %s67 = sphi 0, %s65
      %s68 = sphi 0, %s67
      %s82 = sphi 0, %s68
      %s88 = sphi 0, %s90
      %s91 = sphi 0, %s88
      %s92 = sphi 0, %s91
      %s108 = sphi 0, %s92
    $region4: #{tpu_custom_call.1} parent=1 // loop_header_branch
      %18 = sbr.rel (%p16) target = $region8
    $region5: #{tpu_custom_call.1} parent=1 // loop_body
      %s20 = ssub.s32 %s15, 1
      %s21 = ssub.s32 %s15, 2
      %s22 = sadd.s32 %s15, 1
      %s24 = sadd.s32 %s23, 1
      %p27 = scmp.eq.s32.totalorder %s15, 1
      %p28 = scmp.ne.s32.totalorder %s23, %s25
      %p29 = scmp.eq.s32.totalorder %s15, 0
      %p30 = por %p28, %p29
      %p31 = scmp.ne.s32.totalorder %s23, %s25
      %p32 = scmp.eq.s32.totalorder %s20, 1
      %p33 = por %p31, %p32
      %p34 = scmp.ne.s32.totalorder %s25, %s26
      %p35 = scmp.eq.s32.totalorder %s20, 0
      %p36 = por %p34, %p35
      %p37 = scmp.ne.s32.totalorder %s25, %s26
      %p38 = scmp.eq.s32.totalorder %s21, 1
      %p39 = por %p37, %p38
      %p41 = scmp.ne.s32.totalorder %s26, %s40
      %p42 = scmp.eq.s32.totalorder %s21, 0
      %p43 = por %p41, %p42
      %s45 = sadd.s32 %s44, 1
      %p48 = scmp.eq.s32.totalorder %s15, 1
      %p49 = scmp.ne.s32.totalorder %s44, %s46
      %p50 = scmp.eq.s32.totalorder %s15, 0
      %p51 = por %p49, %p50
      %p52 = scmp.ne.s32.totalorder %s44, %s46
      %p53 = scmp.eq.s32.totalorder %s20, 1
      %p54 = por %p52, %p53
      %p55 = scmp.ne.s32.totalorder %s46, %s47
      %p56 = scmp.eq.s32.totalorder %s20, 0
      %p57 = por %p55, %p56
      %p58 = scmp.ne.s32.totalorder %s46, %s47
      %p59 = scmp.eq.s32.totalorder %s21, 1
      %p60 = por %p58, %p59
      %p62 = scmp.ne.s32.totalorder %s47, %s61
      %p63 = scmp.eq.s32.totalorder %s21, 0
      %p64 = por %p62, %p63
      %s66 = sadd.s32 %s65, 1
      %p69 = scmp.eq.s32.totalorder %s15, 1
      %p70 = scmp.ne.s32.totalorder %s65, %s67
      %p71 = scmp.eq.s32.totalorder %s15, 0
      %p72 = por %p70, %p71
      %p73 = scmp.ne.s32.totalorder %s65, %s67
      %p74 = scmp.eq.s32.totalorder %s20, 1
      %p75 = por %p73, %p74
      %p76 = scmp.ne.s32.totalorder %s67, %s68
      %p77 = scmp.eq.s32.totalorder %s20, 0
      %p78 = por %p76, %p77
      %p79 = scmp.ne.s32.totalorder %s67, %s68
      %p80 = scmp.eq.s32.totalorder %s21, 1
      %p81 = por %p79, %p80
      %p83 = scmp.ne.s32.totalorder %s68, %s82
      %p84 = scmp.eq.s32.totalorder %s21, 0
      %p85 = por %p83, %p84
      %s86 = ssub.s32 %s15, %s22
      %p87 = scmp.eq.s32.totalorder %s86, 0
      %s89 = sadd.s32 %s88, 1
      %s90 = scalar_select %p87, %s88, %s89
      %p93 = pneg %p87
      %p94 = scmp.eq.s32.totalorder %s15, 1
      %p95 = por %p93, %p94
      %p96 = scmp.ne.s32.totalorder %s88, %s91
      %p97 = scmp.eq.s32.totalorder %s15, 0
      %p98 = por %p96, %p97
      %p99 = scmp.ne.s32.totalorder %s88, %s91
      %p100 = scmp.eq.s32.totalorder %s20, 1
      %p101 = por %p99, %p100
      %p102 = scmp.ne.s32.totalorder %s91, %s92
      %p103 = scmp.eq.s32.totalorder %s20, 0
      %p104 = por %p102, %p103
      %p105 = scmp.ne.s32.totalorder %s91, %s92
      %p106 = scmp.eq.s32.totalorder %s21, 1
      %p107 = por %p105, %p106
      %p109 = scmp.ne.s32.totalorder %s92, %s108
      %p110 = scmp.eq.s32.totalorder %s21, 0
      %p111 = por %p109, %p110
      %p112 = scmp.le.s32.totalorder 1, %s15
      %p113 = scmp.lt.s32.totalorder %s15, 3
      %p114 = pnand %p112, %p113
      %p115 = pneg %p114
      // Predicated region
      $region9: #{tpu_custom_call.1} parent=5 // pred_check
        _
      $region10: #{tpu_custom_call.1} parent=5 // pred_check_branch
        %117 = sbr.rel (%p114) target = $region12
      $region11: #{tpu_custom_call.1} parent=5 // pred_region
        %s118 = ssub.s32 %s15, 1
        // Predicated region
        $region13: #{tpu_custom_call.1} parent=11 // pred_check
          %p119 = pneg %p36
        $region14: #{tpu_custom_call.1} parent=11 // pred_check_branch
          %121 = sbr.rel (%p119) target = $region16
        $region15: #{tpu_custom_call.1} parent=11 // pred_region
          _
        $region16: #{tpu_custom_call.1} parent=11 // pred_fallthru
          _
        // Predicated region
        $region17: #{tpu_custom_call.1} parent=11 // pred_check
          %p122 = pneg %p57
        $region18: #{tpu_custom_call.1} parent=11 // pred_check_branch
          %124 = sbr.rel (%p122) target = $region20
        $region19: #{tpu_custom_call.1} parent=11 // pred_region
          %s126 = ssub.s32 2560, 2560
          %127 = vsyncadd [#allocation5], %s126
          %s128 = sshll.u32 [#allocation4], 4
          %s129 = int_to_ptr.vmem [resolvable:$true] %s128
          %134 = dma.hbm_to_vmem [thread:$0]  %s2, 2560, %s129, [#allocation5], 256, 256, 16
        $region20: #{tpu_custom_call.1} parent=11 // pred_fallthru
          _
        // Predicated region
        $region21: #{tpu_custom_call.1} parent=11 // pred_check
          %p135 = pneg %p78
        $region22: #{tpu_custom_call.1} parent=11 // pred_check_branch
          %137 = sbr.rel (%p135) target = $region24
        $region23: #{tpu_custom_call.1} parent=11 // pred_region
          _
        $region24: #{tpu_custom_call.1} parent=11 // pred_fallthru
          _
      $region12: #{tpu_custom_call.1} parent=5 // pred_fallthru
        _
      %p138 = scmp.lt.s32.totalorder %s15, 2
      // Predicated region
      $region25: #{tpu_custom_call.1} parent=5 // pred_check
        %p139 = pneg %p138
      $region26: #{tpu_custom_call.1} parent=5 // pred_check_branch
        %141 = sbr.rel (%p139) target = $region28
      $region27: #{tpu_custom_call.1} parent=5 // pred_region
        _
      $region28: #{tpu_custom_call.1} parent=5 // pred_fallthru
        _
      %p142 = scmp.le.s32.totalorder 1, %s15
      %p143 = scmp.lt.s32.totalorder %s15, 3
      %p144 = pnand %p142, %p143
      %p145 = pneg %p144
      // Predicated region
      $region29: #{tpu_custom_call.1} parent=5 // pred_check
        _
      $region30: #{tpu_custom_call.1} parent=5 // pred_check_branch
        %147 = sbr.rel (%p144) target = $region32
      $region31: #{tpu_custom_call.1} parent=5 // pred_region
        %s148 = ssub.s32 %s15, 1
        // Predicated region
        $region33: #{tpu_custom_call.1} parent=31 // pred_check
          %p149 = pneg %p57
        $region34: #{tpu_custom_call.1} parent=31 // pred_check_branch
          %151 = sbr.rel (%p149) target = $region36
        $region35: #{tpu_custom_call.1} parent=31 // pred_region
          %152 = dma.done [#allocation5], 2560
        $region36: #{tpu_custom_call.1} parent=31 // pred_fallthru
          _
        %p153 = pneg %p36
        %p154 = pneg %p33
        %p155 = pneg %p57
        %p156 = pneg %p54
        %p157 = pneg %p78
        %p158 = pneg %p75
        %p159 = pneg %p104
        %p160 = pneg %p101
        %s161 = smul.u32 24, %s20
        %p162 = scmp.lt.s32.totalorder %s161, 47
        %s163 = scalar_select %p162, %s161, 47
        %s164 = smul.addr %s163, 40
        %s165 = smul.addr %s164, 8
        %s166 = scalar_lea.vmem %s4, %s165
        %s167 = smul.u32 24, %s20
        %p168 = scmp.lt.s32.totalorder %s167, 47
        %s169 = scalar_select %p168, %s167, 47
        %s170 = smul.addr %s169, 40
        %s171 = smul.addr %s170, 8
        %s172 = scalar_lea.vmem %s4, %s171
        %s173 = smul.u32 24, %s20
        %s174 = smul.u32 %s20, 24
        %v175 = vld [vmem:[%s1] sm:$0x1f]
        %v176 = vld [vmem:[%s1 + $0x8] sm:$0x1f]
        %v177 = vld [vmem:[%s1 + $0x10] sm:$0x1f]
        %v178 = vld [vmem:[%s1 + $0x18] sm:$0x1f]
        %179 = vst [vmem:[%s172] sm:$0x1f] %v175
        %180 = vst [vmem:[%s172 + $0x8] sm:$0x1f] %v176
        %181 = vst [vmem:[%s172 + $0x10] sm:$0x1f] %v177
        %182 = vst [vmem:[%s172 + $0x18] sm:$0x1f] %v178
        %183 = vst [vmem:[%s172 + $0x140] sm:$0x1f] %v175
        %184 = vst [vmem:[%s172 + $0x148] sm:$0x1f] %v176
        %185 = vst [vmem:[%s172 + $0x150] sm:$0x1f] %v177
        %186 = vst [vmem:[%s172 + $0x158] sm:$0x1f] %v178
        %187 = vst [vmem:[%s172 + $0x280] sm:$0x1f] %v175
        %188 = vst [vmem:[%s172 + $0x288] sm:$0x1f] %v176
        %189 = vst [vmem:[%s172 + $0x290] sm:$0x1f] %v177
        %190 = vst [vmem:[%s172 + $0x298] sm:$0x1f] %v178
        %191 = vst [vmem:[%s172 + $0x3c0] sm:$0x1f] %v175
        %192 = vst [vmem:[%s172 + $0x3c8] sm:$0x1f] %v176
        %193 = vst [vmem:[%s172 + $0x3d0] sm:$0x1f] %v177
        %194 = vst [vmem:[%s172 + $0x3d8] sm:$0x1f] %v178
        %195 = vst [vmem:[%s172 + $0x500] sm:$0x1f] %v175
        %196 = vst [vmem:[%s172 + $0x508] sm:$0x1f] %v176
        %197 = vst [vmem:[%s172 + $0x510] sm:$0x1f] %v177
        %198 = vst [vmem:[%s172 + $0x518] sm:$0x1f] %v178
        %199 = vst [vmem:[%s172 + $0x640] sm:$0x1f] %v175
        %200 = vst [vmem:[%s172 + $0x648] sm:$0x1f] %v176
        %201 = vst [vmem:[%s172 + $0x650] sm:$0x1f] %v177
        %202 = vst [vmem:[%s172 + $0x658] sm:$0x1f] %v178
        %203 = vst [vmem:[%s172 + $0x780] sm:$0x1f] %v175
        %204 = vst [vmem:[%s172 + $0x788] sm:$0x1f] %v176
        %205 = vst [vmem:[%s172 + $0x790] sm:$0x1f] %v177
        %206 = vst [vmem:[%s172 + $0x798] sm:$0x1f] %v178
        %207 = vst [vmem:[%s172 + $0x8c0] sm:$0x1f] %v175
        %208 = vst [vmem:[%s172 + $0x8c8] sm:$0x1f] %v176
        %209 = vst [vmem:[%s172 + $0x8d0] sm:$0x1f] %v177
        %210 = vst [vmem:[%s172 + $0x8d8] sm:$0x1f] %v178
        %211 = vst [vmem:[%s172 + $0xa00] sm:$0x1f] %v175
        %212 = vst [vmem:[%s172 + $0xa08] sm:$0x1f] %v176
        %213 = vst [vmem:[%s172 + $0xa10] sm:$0x1f] %v177
        %214 = vst [vmem:[%s172 + $0xa18] sm:$0x1f] %v178
        %215 = vst [vmem:[%s172 + $0xb40] sm:$0x1f] %v175
        %216 = vst [vmem:[%s172 + $0xb48] sm:$0x1f] %v176
        %217 = vst [vmem:[%s172 + $0xb50] sm:$0x1f] %v177
        %218 = vst [vmem:[%s172 + $0xb58] sm:$0x1f] %v178
        %219 = vst [vmem:[%s172 + $0xc80] sm:$0x1f] %v175
        %220 = vst [vmem:[%s172 + $0xc88] sm:$0x1f] %v176
        %221 = vst [vmem:[%s172 + $0xc90] sm:$0x1f] %v177
        %222 = vst [vmem:[%s172 + $0xc98] sm:$0x1f] %v178
        %223 = vst [vmem:[%s172 + $0xdc0] sm:$0x1f] %v175
        %224 = vst [vmem:[%s172 + $0xdc8] sm:$0x1f] %v176
        %225 = vst [vmem:[%s172 + $0xdd0] sm:$0x1f] %v177
        %226 = vst [vmem:[%s172 + $0xdd8] sm:$0x1f] %v178
        %227 = vst [vmem:[%s172 + $0xf00] sm:$0x1f] %v175
        %228 = vst [vmem:[%s172 + $0xf08] sm:$0x1f] %v176
        %229 = vst [vmem:[%s172 + $0xf10] sm:$0x1f] %v177
        %230 = vst [vmem:[%s172 + $0xf18] sm:$0x1f] %v178
        %231 = vst [vmem:[%s172 + $0x1040] sm:$0x1f] %v175
        %232 = vst [vmem:[%s172 + $0x1048] sm:$0x1f] %v176
        %233 = vst [vmem:[%s172 + $0x1050] sm:$0x1f] %v177
        %234 = vst [vmem:[%s172 + $0x1058] sm:$0x1f] %v178
        %235 = vst [vmem:[%s172 + $0x1180] sm:$0x1f] %v175
        %236 = vst [vmem:[%s172 + $0x1188] sm:$0x1f] %v176
        %237 = vst [vmem:[%s172 + $0x1190] sm:$0x1f] %v177
        %238 = vst [vmem:[%s172 + $0x1198] sm:$0x1f] %v178
        %239 = vst [vmem:[%s172 + $0x12c0] sm:$0x1f] %v175
        %240 = vst [vmem:[%s172 + $0x12c8] sm:$0x1f] %v176
        %241 = vst [vmem:[%s172 + $0x12d0] sm:$0x1f] %v177
        %242 = vst [vmem:[%s172 + $0x12d8] sm:$0x1f] %v178
        %243 = vst [vmem:[%s172 + $0x1400] sm:$0x1f] %v175
        %244 = vst [vmem:[%s172 + $0x1408] sm:$0x1f] %v176
        %245 = vst [vmem:[%s172 + $0x1410] sm:$0x1f] %v177
        %246 = vst [vmem:[%s172 + $0x1418] sm:$0x1f] %v178
        %247 = vst [vmem:[%s172 + $0x1540] sm:$0x1f] %v175
        %248 = vst [vmem:[%s172 + $0x1548] sm:$0x1f] %v176
        %249 = vst [vmem:[%s172 + $0x1550] sm:$0x1f] %v177
        %250 = vst [vmem:[%s172 + $0x1558] sm:$0x1f] %v178
        %251 = vst [vmem:[%s172 + $0x1680] sm:$0x1f] %v175
        %252 = vst [vmem:[%s172 + $0x1688] sm:$0x1f] %v176
        %253 = vst [vmem:[%s172 + $0x1690] sm:$0x1f] %v177
        %254 = vst [vmem:[%s172 + $0x1698] sm:$0x1f] %v178
        %255 = vst [vmem:[%s172 + $0x17c0] sm:$0x1f] %v175
        %256 = vst [vmem:[%s172 + $0x17c8] sm:$0x1f] %v176
        %257 = vst [vmem:[%s172 + $0x17d0] sm:$0x1f] %v177
        %258 = vst [vmem:[%s172 + $0x17d8] sm:$0x1f] %v178
        %259 = vst [vmem:[%s172 + $0x1900] sm:$0x1f] %v175
        %260 = vst [vmem:[%s172 + $0x1908] sm:$0x1f] %v176
        %261 = vst [vmem:[%s172 + $0x1910] sm:$0x1f] %v177
        %262 = vst [vmem:[%s172 + $0x1918] sm:$0x1f] %v178
        %263 = vst [vmem:[%s172 + $0x1a40] sm:$0x1f] %v175
        %264 = vst [vmem:[%s172 + $0x1a48] sm:$0x1f] %v176
        %265 = vst [vmem:[%s172 + $0x1a50] sm:$0x1f] %v177
        %266 = vst [vmem:[%s172 + $0x1a58] sm:$0x1f] %v178
        %267 = vst [vmem:[%s172 + $0x1b80] sm:$0x1f] %v175
        %268 = vst [vmem:[%s172 + $0x1b88] sm:$0x1f] %v176
        %269 = vst [vmem:[%s172 + $0x1b90] sm:$0x1f] %v177
        %270 = vst [vmem:[%s172 + $0x1b98] sm:$0x1f] %v178
        %271 = vst [vmem:[%s172 + $0x1cc0] sm:$0x1f] %v175
        %272 = vst [vmem:[%s172 + $0x1cc8] sm:$0x1f] %v176
        %273 = vst [vmem:[%s172 + $0x1cd0] sm:$0x1f] %v177
        %274 = vst [vmem:[%s172 + $0x1cd8] sm:$0x1f] %v178
        %v275 = vld [vmem:[%s3] sm:$0xff]
        %v276 = vld [vmem:[%s3 + $0x8] sm:$0xff]
        %v277 = vld [vmem:[%s3 + $0x10] sm:$0xff]
        %v278 = vld [vmem:[%s3 + $0x18] sm:$0xff]
        %v279 = vld [vmem:[%s3 + $0x20] sm:$0xff]
        %v280 = vld [vmem:[%s3 + $0x28] sm:$0xff]
        %v281 = vld [vmem:[%s3 + $0x30] sm:$0xff]
        %v282 = vld [vmem:[%s3 + $0x38] sm:$0xff]
        %v283 = vld [vmem:[%s3 + $0x40] sm:$0xff]
        %v284 = vld [vmem:[%s3 + $0x48] sm:$0xff]
        %v285 = vld [vmem:[%s3 + $0x50] sm:$0xff]
        %v286 = vld [vmem:[%s3 + $0x58] sm:$0xff]
        %v287 = vld [vmem:[%s3 + $0x60] sm:$0xff]
        %v288 = vld [vmem:[%s3 + $0x68] sm:$0xff]
        %v289 = vld [vmem:[%s3 + $0x70] sm:$0xff]
        %v290 = vld [vmem:[%s3 + $0x78] sm:$0xff]
        %v291 = vld [vmem:[%s3 + $0x80] sm:$0xff]
        %v292 = vld [vmem:[%s3 + $0x88] sm:$0xff]
        %v293 = vld [vmem:[%s3 + $0x90] sm:$0xff]
        %v294 = vld [vmem:[%s3 + $0x98] sm:$0xff]
        %v295 = vld [vmem:[%s3 + $0xa0] sm:$0xff]
        %v296 = vld [vmem:[%s3 + $0xa8] sm:$0xff]
        %v297 = vld [vmem:[%s3 + $0xb0] sm:$0xff]
        %v298 = vld [vmem:[%s3 + $0xb8] sm:$0xff]
        %v299 = vld [vmem:[%s3 + $0xc0] sm:$0xff]
        %v300 = vld [vmem:[%s3 + $0xc8] sm:$0xff]
        %v301 = vld [vmem:[%s3 + $0xd0] sm:$0xff]
        %v302 = vld [vmem:[%s3 + $0xd8] sm:$0xff]
        %v303 = vld [vmem:[%s3 + $0xe0] sm:$0xff]
        %v304 = vld [vmem:[%s3 + $0xe8] sm:$0xff]
        %v305 = vld [vmem:[%s3 + $0xf0] sm:$0xff]
        %v306 = vld [vmem:[%s3 + $0xf8] sm:$0xff]
        %v307 = vld [vmem:[%s3 + $0x100] sm:$0xf]
        %v308 = vld [vmem:[%s3 + $0x108] sm:$0xf]
        %v309 = vld [vmem:[%s3 + $0x110] sm:$0xf]
        %v310 = vld [vmem:[%s3 + $0x118] sm:$0xf]
        %vm347 = vcmask 1040384
        %v348 = vrot.slane %v275, 7
        %v349 = vrot.slane %v276, 7
        %v350 = vrot.slane %v277, 7
        %v351 = vrot.slane %v278, 7
        %v352 = vrot.slane %v279, 7
        %v353 = vsel %vm347, %v348, %v352
        %v354 = vrot.slane %v280, 7
        %v355 = vsel %vm347, %v349, %v354
        %v356 = vrot.slane %v281, 7
        %v357 = vsel %vm347, %v350, %v356
        %v358 = vrot.slane %v282, 7
        %v359 = vsel %vm347, %v351, %v358
        %v360 = vrot.slane %v283, 7
        %v361 = vsel %vm347, %v352, %v360
        %v362 = vrot.slane %v284, 7
        %v363 = vsel %vm347, %v354, %v362
        %v364 = vrot.slane %v285, 7
        %v365 = vsel %vm347, %v356, %v364
        %v366 = vrot.slane %v286, 7
        %v367 = vsel %vm347, %v358, %v366
        %v368 = vrot.slane %v287, 7
        %v369 = vsel %vm347, %v360, %v368
        %v370 = vrot.slane %v288, 7
        %v371 = vsel %vm347, %v362, %v370
        %v372 = vrot.slane %v289, 7
        %v373 = vsel %vm347, %v364, %v372
        %v374 = vrot.slane %v290, 7
        %v375 = vsel %vm347, %v366, %v374
        %v376 = vrot.slane %v291, 7
        %v377 = vsel %vm347, %v368, %v376
        %v378 = vrot.slane %v292, 7
        %v379 = vsel %vm347, %v370, %v378
        %v380 = vrot.slane %v293, 7
        %v381 = vsel %vm347, %v372, %v380
        %v382 = vrot.slane %v294, 7
        %v383 = vsel %vm347, %v374, %v382
        %v384 = vrot.slane %v295, 7
        %v385 = vsel %vm347, %v376, %v384
        %v386 = vrot.slane %v296, 7
        %v387 = vsel %vm347, %v378, %v386
        %v388 = vrot.slane %v297, 7
        %v389 = vsel %vm347, %v380, %v388
        %v390 = vrot.slane %v298, 7
        %v391 = vsel %vm347, %v382, %v390
        %v392 = vrot.slane %v299, 7
        %v393 = vsel %vm347, %v384, %v392
        %v394 = vrot.slane %v300, 7
        %v395 = vsel %vm347, %v386, %v394
        %v396 = vrot.slane %v301, 7
        %v397 = vsel %vm347, %v388, %v396
        %v398 = vrot.slane %v302, 7
        %v399 = vsel %vm347, %v390, %v398
        %v400 = vrot.slane %v303, 7
        %v401 = vsel %vm347, %v392, %v400
        %v402 = vrot.slane %v304, 7
        %v403 = vsel %vm347, %v394, %v402
        %v404 = vrot.slane %v305, 7
        %v405 = vsel %vm347, %v396, %v404
        %v406 = vrot.slane %v306, 7
        %v407 = vsel %vm347, %v398, %v406
        %v408 = vrot.slane %v307, 7
        %v409 = vsel %vm347, %v400, %v408
        %v410 = vrot.slane %v308, 7
        %v411 = vsel %vm347, %v402, %v410
        %v412 = vrot.slane %v309, 7
        %v413 = vsel %vm347, %v404, %v412
        %v414 = vrot.slane %v310, 7
        %v415 = vsel %vm347, %v406, %v414
        %452 = vst [vmem:[%s172 + $0x20] sm:$0xfe] %v348
        %453 = vst [vmem:[%s172 + $0x28] sm:$0xfe] %v349
        %454 = vst [vmem:[%s172 + $0x30] sm:$0xfe] %v350
        %455 = vst [vmem:[%s172 + $0x38] sm:$0xfe] %v351
        %456 = vst [vmem:[%s172 + $0x40] sm:$0xff] %v353
        %457 = vst [vmem:[%s172 + $0x48] sm:$0xff] %v355
        %458 = vst [vmem:[%s172 + $0x50] sm:$0xff] %v357
        %459 = vst [vmem:[%s172 + $0x58] sm:$0xff] %v359
        %460 = vst [vmem:[%s172 + $0x60] sm:$0xff] %v361
        %461 = vst [vmem:[%s172 + $0x68] sm:$0xff] %v363
        %462 = vst [vmem:[%s172 + $0x70] sm:$0xff] %v365
        %463 = vst [vmem:[%s172 + $0x78] sm:$0xff] %v367
        %464 = vst [vmem:[%s172 + $0x80] sm:$0xff] %v369
        %465 = vst [vmem:[%s172 + $0x88] sm:$0xff] %v371
        %466 = vst [vmem:[%s172 + $0x90] sm:$0xff] %v373
        %467 = vst [vmem:[%s172 + $0x98] sm:$0xff] %v375
        %468 = vst [vmem:[%s172 + $0xa0] sm:$0xff] %v377
        %469 = vst [vmem:[%s172 + $0xa8] sm:$0xff] %v379
        %470 = vst [vmem:[%s172 + $0xb0] sm:$0xff] %v381
        %471 = vst [vmem:[%s172 + $0xb8] sm:$0xff] %v383
        %472 = vst [vmem:[%s172 + $0xc0] sm:$0xff] %v385
        %473 = vst [vmem:[%s172 + $0xc8] sm:$0xff] %v387
        %474 = vst [vmem:[%s172 + $0xd0] sm:$0xff] %v389
        %475 = vst [vmem:[%s172 + $0xd8] sm:$0xff] %v391
        %476 = vst [vmem:[%s172 + $0xe0] sm:$0xff] %v393
        %477 = vst [vmem:[%s172 + $0xe8] sm:$0xff] %v395
        %478 = vst [vmem:[%s172 + $0xf0] sm:$0xff] %v397
        %479 = vst [vmem:[%s172 + $0xf8] sm:$0xff] %v399
        %480 = vst [vmem:[%s172 + $0x100] sm:$0xff] %v401
        %481 = vst [vmem:[%s172 + $0x108] sm:$0xff] %v403
        %482 = vst [vmem:[%s172 + $0x110] sm:$0xff] %v405
        %483 = vst [vmem:[%s172 + $0x118] sm:$0xff] %v407
        %484 = vst [vmem:[%s172 + $0x120] sm:$0x1f] %v409
        %485 = vst [vmem:[%s172 + $0x128] sm:$0x1f] %v411
        %486 = vst [vmem:[%s172 + $0x130] sm:$0x1f] %v413
        %487 = vst [vmem:[%s172 + $0x138] sm:$0x1f] %v415
        %488 = vst [vmem:[%s172 + $0x160] sm:$0xfe] %v348
        %489 = vst [vmem:[%s172 + $0x168] sm:$0xfe] %v349
        %490 = vst [vmem:[%s172 + $0x170] sm:$0xfe] %v350
        %491 = vst [vmem:[%s172 + $0x178] sm:$0xfe] %v351
        %492 = vst [vmem:[%s172 + $0x180] sm:$0xff] %v353
        %493 = vst [vmem:[%s172 + $0x188] sm:$0xff] %v355
        %494 = vst [vmem:[%s172 + $0x190] sm:$0xff] %v357
        %495 = vst [vmem:[%s172 + $0x198] sm:$0xff] %v359
        %496 = vst [vmem:[%s172 + $0x1a0] sm:$0xff] %v361
        %497 = vst [vmem:[%s172 + $0x1a8] sm:$0xff] %v363
        %498 = vst [vmem:[%s172 + $0x1b0] sm:$0xff] %v365
        %499 = vst [vmem:[%s172 + $0x1b8] sm:$0xff] %v367
        %500 = vst [vmem:[%s172 + $0x1c0] sm:$0xff] %v369
        %501 = vst [vmem:[%s172 + $0x1c8] sm:$0xff] %v371
        %502 = vst [vmem:[%s172 + $0x1d0] sm:$0xff] %v373
        %503 = vst [vmem:[%s172 + $0x1d8] sm:$0xff] %v375
        %504 = vst [vmem:[%s172 + $0x1e0] sm:$0xff] %v377
        %505 = vst [vmem:[%s172 + $0x1e8] sm:$0xff] %v379
        %506 = vst [vmem:[%s172 + $0x1f0] sm:$0xff] %v381
        %507 = vst [vmem:[%s172 + $0x1f8] sm:$0xff] %v383
        %508 = vst [vmem:[%s172 + $0x200] sm:$0xff] %v385
        %509 = vst [vmem:[%s172 + $0x208] sm:$0xff] %v387
        %510 = vst [vmem:[%s172 + $0x210] sm:$0xff] %v389
        %511 = vst [vmem:[%s172 + $0x218] sm:$0xff] %v391
        %512 = vst [vmem:[%s172 + $0x220] sm:$0xff] %v393
        %513 = vst [vmem:[%s172 + $0x228] sm:$0xff] %v395
        %514 = vst [vmem:[%s172 + $0x230] sm:$0xff] %v397
        %515 = vst [vmem:[%s172 + $0x238] sm:$0xff] %v399
        %516 = vst [vmem:[%s172 + $0x240] sm:$0xff] %v401
        %517 = vst [vmem:[%s172 + $0x248] sm:$0xff] %v403
        %518 = vst [vmem:[%s172 + $0x250] sm:$0xff] %v405
        %519 = vst [vmem:[%s172 + $0x258] sm:$0xff] %v407
        %520 = vst [vmem:[%s172 + $0x260] sm:$0x1f] %v409
        %521 = vst [vmem:[%s172 + $0x268] sm:$0x1f] %v411
        %522 = vst [vmem:[%s172 + $0x270] sm:$0x1f] %v413
        %523 = vst [vmem:[%s172 + $0x278] sm:$0x1f] %v415
        %524 = vst [vmem:[%s172 + $0x2a0] sm:$0xfe] %v348
        %525 = vst [vmem:[%s172 + $0x2a8] sm:$0xfe] %v349
        %526 = vst [vmem:[%s172 + $0x2b0] sm:$0xfe] %v350
        %527 = vst [vmem:[%s172 + $0x2b8] sm:$0xfe] %v351
        %528 = vst [vmem:[%s172 + $0x2c0] sm:$0xff] %v353
        %529 = vst [vmem:[%s172 + $0x2c8] sm:$0xff] %v355
        %530 = vst [vmem:[%s172 + $0x2d0] sm:$0xff] %v357
        %531 = vst [vmem:[%s172 + $0x2d8] sm:$0xff] %v359
        %532 = vst [vmem:[%s172 + $0x2e0] sm:$0xff] %v361
        %533 = vst [vmem:[%s172 + $0x2e8] sm:$0xff] %v363
        %534 = vst [vmem:[%s172 + $0x2f0] sm:$0xff] %v365
        %535 = vst [vmem:[%s172 + $0x2f8] sm:$0xff] %v367
        %536 = vst [vmem:[%s172 + $0x300] sm:$0xff] %v369
        %537 = vst [vmem:[%s172 + $0x308] sm:$0xff] %v371
        %538 = vst [vmem:[%s172 + $0x310] sm:$0xff] %v373
        %539 = vst [vmem:[%s172 + $0x318] sm:$0xff] %v375
        %540 = vst [vmem:[%s172 + $0x320] sm:$0xff] %v377
        %541 = vst [vmem:[%s172 + $0x328] sm:$0xff] %v379
        %542 = vst [vmem:[%s172 + $0x330] sm:$0xff] %v381
        %543 = vst [vmem:[%s172 + $0x338] sm:$0xff] %v383
        %544 = vst [vmem:[%s172 + $0x340] sm:$0xff] %v385
        %545 = vst [vmem:[%s172 + $0x348] sm:$0xff] %v387
        %546 = vst [vmem:[%s172 + $0x350] sm:$0xff] %v389
        %547 = vst [vmem:[%s172 + $0x358] sm:$0xff] %v391
        %548 = vst [vmem:[%s172 + $0x360] sm:$0xff] %v393
        %549 = vst [vmem:[%s172 + $0x368] sm:$0xff] %v395
        %550 = vst [vmem:[%s172 + $0x370] sm:$0xff] %v397
        %551 = vst [vmem:[%s172 + $0x378] sm:$0xff] %v399
        %552 = vst [vmem:[%s172 + $0x380] sm:$0xff] %v401
        %553 = vst [vmem:[%s172 + $0x388] sm:$0xff] %v403
        %554 = vst [vmem:[%s172 + $0x390] sm:$0xff] %v405
        %555 = vst [vmem:[%s172 + $0x398] sm:$0xff] %v407
        %556 = vst [vmem:[%s172 + $0x3a0] sm:$0x1f] %v409
        %557 = vst [vmem:[%s172 + $0x3a8] sm:$0x1f] %v411
        %558 = vst [vmem:[%s172 + $0x3b0] sm:$0x1f] %v413
        %559 = vst [vmem:[%s172 + $0x3b8] sm:$0x1f] %v415
        %560 = vst [vmem:[%s172 + $0x3e0] sm:$0xfe] %v348
        %561 = vst [vmem:[%s172 + $0x3e8] sm:$0xfe] %v349
        %562 = vst [vmem:[%s172 + $0x3f0] sm:$0xfe] %v350
        %563 = vst [vmem:[%s172 + $0x3f8] sm:$0xfe] %v351
        %564 = vst [vmem:[%s172 + $0x400] sm:$0xff] %v353
        %565 = vst [vmem:[%s172 + $0x408] sm:$0xff] %v355
        %566 = vst [vmem:[%s172 + $0x410] sm:$0xff] %v357
        %567 = vst [vmem:[%s172 + $0x418] sm:$0xff] %v359
        %568 = vst [vmem:[%s172 + $0x420] sm:$0xff] %v361
        %569 = vst [vmem:[%s172 + $0x428] sm:$0xff] %v363
        %570 = vst [vmem:[%s172 + $0x430] sm:$0xff] %v365
        %571 = vst [vmem:[%s172 + $0x438] sm:$0xff] %v367
        %572 = vst [vmem:[%s172 + $0x440] sm:$0xff] %v369
        %573 = vst [vmem:[%s172 + $0x448] sm:$0xff] %v371
        %574 = vst [vmem:[%s172 + $0x450] sm:$0xff] %v373
        %575 = vst [vmem:[%s172 + $0x458] sm:$0xff] %v375
        %576 = vst [vmem:[%s172 + $0x460] sm:$0xff] %v377
        %577 = vst [vmem:[%s172 + $0x468] sm:$0xff] %v379
        %578 = vst [vmem:[%s172 + $0x470] sm:$0xff] %v381
        %579 = vst [vmem:[%s172 + $0x478] sm:$0xff] %v383
        %580 = vst [vmem:[%s172 + $0x480] sm:$0xff] %v385
        %581 = vst [vmem:[%s172 + $0x488] sm:$0xff] %v387
        %582 = vst [vmem:[%s172 + $0x490] sm:$0xff] %v389
        %583 = vst [vmem:[%s172 + $0x498] sm:$0xff] %v391
        %584 = vst [vmem:[%s172 + $0x4a0] sm:$0xff] %v393
        %585 = vst [vmem:[%s172 + $0x4a8] sm:$0xff] %v395
        %586 = vst [vmem:[%s172 + $0x4b0] sm:$0xff] %v397
        %587 = vst [vmem:[%s172 + $0x4b8] sm:$0xff] %v399
        %588 = vst [vmem:[%s172 + $0x4c0] sm:$0xff] %v401
        %589 = vst [vmem:[%s172 + $0x4c8] sm:$0xff] %v403
        %590 = vst [vmem:[%s172 + $0x4d0] sm:$0xff] %v405
        %591 = vst [vmem:[%s172 + $0x4d8] sm:$0xff] %v407
        %592 = vst [vmem:[%s172 + $0x4e0] sm:$0x1f] %v409
        %593 = vst [vmem:[%s172 + $0x4e8] sm:$0x1f] %v411
        %594 = vst [vmem:[%s172 + $0x4f0] sm:$0x1f] %v413
        %595 = vst [vmem:[%s172 + $0x4f8] sm:$0x1f] %v415
        %596 = vst [vmem:[%s172 + $0x520] sm:$0xfe] %v348
        %597 = vst [vmem:[%s172 + $0x528] sm:$0xfe] %v349
        %598 = vst [vmem:[%s172 + $0x530] sm:$0xfe] %v350
        %599 = vst [vmem:[%s172 + $0x538] sm:$0xfe] %v351
        %600 = vst [vmem:[%s172 + $0x540] sm:$0xff] %v353
        %601 = vst [vmem:[%s172 + $0x548] sm:$0xff] %v355
        %602 = vst [vmem:[%s172 + $0x550] sm:$0xff] %v357
        %603 = vst [vmem:[%s172 + $0x558] sm:$0xff] %v359
        %604 = vst [vmem:[%s172 + $0x560] sm:$0xff] %v361
        %605 = vst [vmem:[%s172 + $0x568] sm:$0xff] %v363
        %606 = vst [vmem:[%s172 + $0x570] sm:$0xff] %v365
        %607 = vst [vmem:[%s172 + $0x578] sm:$0xff] %v367
        %608 = vst [vmem:[%s172 + $0x580] sm:$0xff] %v369
        %609 = vst [vmem:[%s172 + $0x588] sm:$0xff] %v371
        %610 = vst [vmem:[%s172 + $0x590] sm:$0xff] %v373
        %611 = vst [vmem:[%s172 + $0x598] sm:$0xff] %v375
        %612 = vst [vmem:[%s172 + $0x5a0] sm:$0xff] %v377
        %613 = vst [vmem:[%s172 + $0x5a8] sm:$0xff] %v379
        %614 = vst [vmem:[%s172 + $0x5b0] sm:$0xff] %v381
        %615 = vst [vmem:[%s172 + $0x5b8] sm:$0xff] %v383
        %616 = vst [vmem:[%s172 + $0x5c0] sm:$0xff] %v385
        %617 = vst [vmem:[%s172 + $0x5c8] sm:$0xff] %v387
        %618 = vst [vmem:[%s172 + $0x5d0] sm:$0xff] %v389
        %619 = vst [vmem:[%s172 + $0x5d8] sm:$0xff] %v391
        %620 = vst [vmem:[%s172 + $0x5e0] sm:$0xff] %v393
        %621 = vst [vmem:[%s172 + $0x5e8] sm:$0xff] %v395
        %622 = vst [vmem:[%s172 + $0x5f0] sm:$0xff] %v397
        %623 = vst [vmem:[%s172 + $0x5f8] sm:$0xff] %v399
        %624 = vst [vmem:[%s172 + $0x600] sm:$0xff] %v401
        %625 = vst [vmem:[%s172 + $0x608] sm:$0xff] %v403
        %626 = vst [vmem:[%s172 + $0x610] sm:$0xff] %v405
        %627 = vst [vmem:[%s172 + $0x618] sm:$0xff] %v407
        %628 = vst [vmem:[%s172 + $0x620] sm:$0x1f] %v409
        %629 = vst [vmem:[%s172 + $0x628] sm:$0x1f] %v411
        %630 = vst [vmem:[%s172 + $0x630] sm:$0x1f] %v413
        %631 = vst [vmem:[%s172 + $0x638] sm:$0x1f] %v415
        %632 = vst [vmem:[%s172 + $0x660] sm:$0xfe] %v348
        %633 = vst [vmem:[%s172 + $0x668] sm:$0xfe] %v349
        %634 = vst [vmem:[%s172 + $0x670] sm:$0xfe] %v350
        %635 = vst [vmem:[%s172 + $0x678] sm:$0xfe] %v351
        %636 = vst [vmem:[%s172 + $0x680] sm:$0xff] %v353
        %637 = vst [vmem:[%s172 + $0x688] sm:$0xff] %v355
        %638 = vst [vmem:[%s172 + $0x690] sm:$0xff] %v357
        %639 = vst [vmem:[%s172 + $0x698] sm:$0xff] %v359
        %640 = vst [vmem:[%s172 + $0x6a0] sm:$0xff] %v361
        %641 = vst [vmem:[%s172 + $0x6a8] sm:$0xff] %v363
        %642 = vst [vmem:[%s172 + $0x6b0] sm:$0xff] %v365
        %643 = vst [vmem:[%s172 + $0x6b8] sm:$0xff] %v367
        %644 = vst [vmem:[%s172 + $0x6c0] sm:$0xff] %v369
        %645 = vst [vmem:[%s172 + $0x6c8] sm:$0xff] %v371
        %646 = vst [vmem:[%s172 + $0x6d0] sm:$0xff] %v373
        %647 = vst [vmem:[%s172 + $0x6d8] sm:$0xff] %v375
        %648 = vst [vmem:[%s172 + $0x6e0] sm:$0xff] %v377
        %649 = vst [vmem:[%s172 + $0x6e8] sm:$0xff] %v379
        %650 = vst [vmem:[%s172 + $0x6f0] sm:$0xff] %v381
        %651 = vst [vmem:[%s172 + $0x6f8] sm:$0xff] %v383
        %652 = vst [vmem:[%s172 + $0x700] sm:$0xff] %v385
        %653 = vst [vmem:[%s172 + $0x708] sm:$0xff] %v387
        %654 = vst [vmem:[%s172 + $0x710] sm:$0xff] %v389
        %655 = vst [vmem:[%s172 + $0x718] sm:$0xff] %v391
        %656 = vst [vmem:[%s172 + $0x720] sm:$0xff] %v393
        %657 = vst [vmem:[%s172 + $0x728] sm:$0xff] %v395
        %658 = vst [vmem:[%s172 + $0x730] sm:$0xff] %v397
        %659 = vst [vmem:[%s172 + $0x738] sm:$0xff] %v399
        %660 = vst [vmem:[%s172 + $0x740] sm:$0xff] %v401
        %661 = vst [vmem:[%s172 + $0x748] sm:$0xff] %v403
        %662 = vst [vmem:[%s172 + $0x750] sm:$0xff] %v405
        %663 = vst [vmem:[%s172 + $0x758] sm:$0xff] %v407
        %664 = vst [vmem:[%s172 + $0x760] sm:$0x1f] %v409
        %665 = vst [vmem:[%s172 + $0x768] sm:$0x1f] %v411
        %666 = vst [vmem:[%s172 + $0x770] sm:$0x1f] %v413
        %667 = vst [vmem:[%s172 + $0x778] sm:$0x1f] %v415
        %668 = vst [vmem:[%s172 + $0x7a0] sm:$0xfe] %v348
        %669 = vst [vmem:[%s172 + $0x7a8] sm:$0xfe] %v349
        %670 = vst [vmem:[%s172 + $0x7b0] sm:$0xfe] %v350
        %671 = vst [vmem:[%s172 + $0x7b8] sm:$0xfe] %v351
        %672 = vst [vmem:[%s172 + $0x7c0] sm:$0xff] %v353
        %673 = vst [vmem:[%s172 + $0x7c8] sm:$0xff] %v355
        %674 = vst [vmem:[%s172 + $0x7d0] sm:$0xff] %v357
        %675 = vst [vmem:[%s172 + $0x7d8] sm:$0xff] %v359
        %676 = vst [vmem:[%s172 + $0x7e0] sm:$0xff] %v361
        %677 = vst [vmem:[%s172 + $0x7e8] sm:$0xff] %v363
        %678 = vst [vmem:[%s172 + $0x7f0] sm:$0xff] %v365
        %679 = vst [vmem:[%s172 + $0x7f8] sm:$0xff] %v367
        %680 = vst [vmem:[%s172 + $0x800] sm:$0xff] %v369
        %681 = vst [vmem:[%s172 + $0x808] sm:$0xff] %v371
        %682 = vst [vmem:[%s172 + $0x810] sm:$0xff] %v373
        %683 = vst [vmem:[%s172 + $0x818] sm:$0xff] %v375
        %684 = vst [vmem:[%s172 + $0x820] sm:$0xff] %v377
        %685 = vst [vmem:[%s172 + $0x828] sm:$0xff] %v379
        %686 = vst [vmem:[%s172 + $0x830] sm:$0xff] %v381
        %687 = vst [vmem:[%s172 + $0x838] sm:$0xff] %v383
        %688 = vst [vmem:[%s172 + $0x840] sm:$0xff] %v385
        %689 = vst [vmem:[%s172 + $0x848] sm:$0xff] %v387
        %690 = vst [vmem:[%s172 + $0x850] sm:$0xff] %v389
        %691 = vst [vmem:[%s172 + $0x858] sm:$0xff] %v391
        %692 = vst [vmem:[%s172 + $0x860] sm:$0xff] %v393
        %693 = vst [vmem:[%s172 + $0x868] sm:$0xff] %v395
        %694 = vst [vmem:[%s172 + $0x870] sm:$0xff] %v397
        %695 = vst [vmem:[%s172 + $0x878] sm:$0xff] %v399
        %696 = vst [vmem:[%s172 + $0x880] sm:$0xff] %v401
        %697 = vst [vmem:[%s172 + $0x888] sm:$0xff] %v403
        %698 = vst [vmem:[%s172 + $0x890] sm:$0xff] %v405
        %699 = vst [vmem:[%s172 + $0x898] sm:$0xff] %v407
        %700 = vst [vmem:[%s172 + $0x8a0] sm:$0x1f] %v409
        %701 = vst [vmem:[%s172 + $0x8a8] sm:$0x1f] %v411
        %702 = vst [vmem:[%s172 + $0x8b0] sm:$0x1f] %v413
        %703 = vst [vmem:[%s172 + $0x8b8] sm:$0x1f] %v415
        %704 = vst [vmem:[%s172 + $0x8e0] sm:$0xfe] %v348
        %705 = vst [vmem:[%s172 + $0x8e8] sm:$0xfe] %v349
        %706 = vst [vmem:[%s172 + $0x8f0] sm:$0xfe] %v350
        %707 = vst [vmem:[%s172 + $0x8f8] sm:$0xfe] %v351
        %708 = vst [vmem:[%s172 + $0x900] sm:$0xff] %v353
        %709 = vst [vmem:[%s172 + $0x908] sm:$0xff] %v355
        %710 = vst [vmem:[%s172 + $0x910] sm:$0xff] %v357
        %711 = vst [vmem:[%s172 + $0x918] sm:$0xff] %v359
        %712 = vst [vmem:[%s172 + $0x920] sm:$0xff] %v361
        %713 = vst [vmem:[%s172 + $0x928] sm:$0xff] %v363
        %714 = vst [vmem:[%s172 + $0x930] sm:$0xff] %v365
        %715 = vst [vmem:[%s172 + $0x938] sm:$0xff] %v367
        %716 = vst [vmem:[%s172 + $0x940] sm:$0xff] %v369
        %717 = vst [vmem:[%s172 + $0x948] sm:$0xff] %v371
        %718 = vst [vmem:[%s172 + $0x950] sm:$0xff] %v373
        %719 = vst [vmem:[%s172 + $0x958] sm:$0xff] %v375
        %720 = vst [vmem:[%s172 + $0x960] sm:$0xff] %v377
        %721 = vst [vmem:[%s172 + $0x968] sm:$0xff] %v379
        %722 = vst [vmem:[%s172 + $0x970] sm:$0xff] %v381
        %723 = vst [vmem:[%s172 + $0x978] sm:$0xff] %v383
        %724 = vst [vmem:[%s172 + $0x980] sm:$0xff] %v385
        %725 = vst [vmem:[%s172 + $0x988] sm:$0xff] %v387
        %726 = vst [vmem:[%s172 + $0x990] sm:$0xff] %v389
        %727 = vst [vmem:[%s172 + $0x998] sm:$0xff] %v391
        %728 = vst [vmem:[%s172 + $0x9a0] sm:$0xff] %v393
        %729 = vst [vmem:[%s172 + $0x9a8] sm:$0xff] %v395
        %730 = vst [vmem:[%s172 + $0x9b0] sm:$0xff] %v397
        %731 = vst [vmem:[%s172 + $0x9b8] sm:$0xff] %v399
        %732 = vst [vmem:[%s172 + $0x9c0] sm:$0xff] %v401
        %733 = vst [vmem:[%s172 + $0x9c8] sm:$0xff] %v403
        %734 = vst [vmem:[%s172 + $0x9d0] sm:$0xff] %v405
        %735 = vst [vmem:[%s172 + $0x9d8] sm:$0xff] %v407
        %736 = vst [vmem:[%s172 + $0x9e0] sm:$0x1f] %v409
        %737 = vst [vmem:[%s172 + $0x9e8] sm:$0x1f] %v411
        %738 = vst [vmem:[%s172 + $0x9f0] sm:$0x1f] %v413
        %739 = vst [vmem:[%s172 + $0x9f8] sm:$0x1f] %v415
        %740 = vst [vmem:[%s172 + $0xa20] sm:$0xfe] %v348
        %741 = vst [vmem:[%s172 + $0xa28] sm:$0xfe] %v349
        %742 = vst [vmem:[%s172 + $0xa30] sm:$0xfe] %v350
        %743 = vst [vmem:[%s172 + $0xa38] sm:$0xfe] %v351
        %744 = vst [vmem:[%s172 + $0xa40] sm:$0xff] %v353
        %745 = vst [vmem:[%s172 + $0xa48] sm:$0xff] %v355
        %746 = vst [vmem:[%s172 + $0xa50] sm:$0xff] %v357
        %747 = vst [vmem:[%s172 + $0xa58] sm:$0xff] %v359
        %748 = vst [vmem:[%s172 + $0xa60] sm:$0xff] %v361
        %749 = vst [vmem:[%s172 + $0xa68] sm:$0xff] %v363
        %750 = vst [vmem:[%s172 + $0xa70] sm:$0xff] %v365
        %751 = vst [vmem:[%s172 + $0xa78] sm:$0xff] %v367
        %752 = vst [vmem:[%s172 + $0xa80] sm:$0xff] %v369
        %753 = vst [vmem:[%s172 + $0xa88] sm:$0xff] %v371
        %754 = vst [vmem:[%s172 + $0xa90] sm:$0xff] %v373
        %755 = vst [vmem:[%s172 + $0xa98] sm:$0xff] %v375
        %756 = vst [vmem:[%s172 + $0xaa0] sm:$0xff] %v377
        %757 = vst [vmem:[%s172 + $0xaa8] sm:$0xff] %v379
        %758 = vst [vmem:[%s172 + $0xab0] sm:$0xff] %v381
        %759 = vst [vmem:[%s172 + $0xab8] sm:$0xff] %v383
        %760 = vst [vmem:[%s172 + $0xac0] sm:$0xff] %v385
        %761 = vst [vmem:[%s172 + $0xac8] sm:$0xff] %v387
        %762 = vst [vmem:[%s172 + $0xad0] sm:$0xff] %v389
        %763 = vst [vmem:[%s172 + $0xad8] sm:$0xff] %v391
        %764 = vst [vmem:[%s172 + $0xae0] sm:$0xff] %v393
        %765 = vst [vmem:[%s172 + $0xae8] sm:$0xff] %v395
        %766 = vst [vmem:[%s172 + $0xaf0] sm:$0xff] %v397
        %767 = vst [vmem:[%s172 + $0xaf8] sm:$0xff] %v399
        %768 = vst [vmem:[%s172 + $0xb00] sm:$0xff] %v401
        %769 = vst [vmem:[%s172 + $0xb08] sm:$0xff] %v403
        %770 = vst [vmem:[%s172 + $0xb10] sm:$0xff] %v405
        %771 = vst [vmem:[%s172 + $0xb18] sm:$0xff] %v407
        %772 = vst [vmem:[%s172 + $0xb20] sm:$0x1f] %v409
        %773 = vst [vmem:[%s172 + $0xb28] sm:$0x1f] %v411
        %774 = vst [vmem:[%s172 + $0xb30] sm:$0x1f] %v413
        %775 = vst [vmem:[%s172 + $0xb38] sm:$0x1f] %v415
        %776 = vst [vmem:[%s172 + $0xb60] sm:$0xfe] %v348
        %777 = vst [vmem:[%s172 + $0xb68] sm:$0xfe] %v349
        %778 = vst [vmem:[%s172 + $0xb70] sm:$0xfe] %v350
        %779 = vst [vmem:[%s172 + $0xb78] sm:$0xfe] %v351
        %780 = vst [vmem:[%s172 + $0xb80] sm:$0xff] %v353
        %781 = vst [vmem:[%s172 + $0xb88] sm:$0xff] %v355
        %782 = vst [vmem:[%s172 + $0xb90] sm:$0xff] %v357
        %783 = vst [vmem:[%s172 + $0xb98] sm:$0xff] %v359
        %784 = vst [vmem:[%s172 + $0xba0] sm:$0xff] %v361
        %785 = vst [vmem:[%s172 + $0xba8] sm:$0xff] %v363
        %786 = vst [vmem:[%s172 + $0xbb0] sm:$0xff] %v365
        %787 = vst [vmem:[%s172 + $0xbb8] sm:$0xff] %v367
        %788 = vst [vmem:[%s172 + $0xbc0] sm:$0xff] %v369
        %789 = vst [vmem:[%s172 + $0xbc8] sm:$0xff] %v371
        %790 = vst [vmem:[%s172 + $0xbd0] sm:$0xff] %v373
        %791 = vst [vmem:[%s172 + $0xbd8] sm:$0xff] %v375
        %792 = vst [vmem:[%s172 + $0xbe0] sm:$0xff] %v377
        %793 = vst [vmem:[%s172 + $0xbe8] sm:$0xff] %v379
        %794 = vst [vmem:[%s172 + $0xbf0] sm:$0xff] %v381
        %795 = vst [vmem:[%s172 + $0xbf8] sm:$0xff] %v383
        %796 = vst [vmem:[%s172 + $0xc00] sm:$0xff] %v385
        %797 = vst [vmem:[%s172 + $0xc08] sm:$0xff] %v387
        %798 = vst [vmem:[%s172 + $0xc10] sm:$0xff] %v389
        %799 = vst [vmem:[%s172 + $0xc18] sm:$0xff] %v391
        %800 = vst [vmem:[%s172 + $0xc20] sm:$0xff] %v393
        %801 = vst [vmem:[%s172 + $0xc28] sm:$0xff] %v395
        %802 = vst [vmem:[%s172 + $0xc30] sm:$0xff] %v397
        %803 = vst [vmem:[%s172 + $0xc38] sm:$0xff] %v399
        %804 = vst [vmem:[%s172 + $0xc40] sm:$0xff] %v401
        %805 = vst [vmem:[%s172 + $0xc48] sm:$0xff] %v403
        %806 = vst [vmem:[%s172 + $0xc50] sm:$0xff] %v405
        %807 = vst [vmem:[%s172 + $0xc58] sm:$0xff] %v407
        %808 = vst [vmem:[%s172 + $0xc60] sm:$0x1f] %v409
        %809 = vst [vmem:[%s172 + $0xc68] sm:$0x1f] %v411
        %810 = vst [vmem:[%s172 + $0xc70] sm:$0x1f] %v413
        %811 = vst [vmem:[%s172 + $0xc78] sm:$0x1f] %v415
        %812 = vst [vmem:[%s172 + $0xca0] sm:$0xfe] %v348
        %813 = vst [vmem:[%s172 + $0xca8] sm:$0xfe] %v349
        %814 = vst [vmem:[%s172 + $0xcb0] sm:$0xfe] %v350
        %815 = vst [vmem:[%s172 + $0xcb8] sm:$0xfe] %v351
        %816 = vst [vmem:[%s172 + $0xcc0] sm:$0xff] %v353
        %817 = vst [vmem:[%s172 + $0xcc8] sm:$0xff] %v355
        %818 = vst [vmem:[%s172 + $0xcd0] sm:$0xff] %v357
        %819 = vst [vmem:[%s172 + $0xcd8] sm:$0xff] %v359
        %820 = vst [vmem:[%s172 + $0xce0] sm:$0xff] %v361
        %821 = vst [vmem:[%s172 + $0xce8] sm:$0xff] %v363
        %822 = vst [vmem:[%s172 + $0xcf0] sm:$0xff] %v365
        %823 = vst [vmem:[%s172 + $0xcf8] sm:$0xff] %v367
        %824 = vst [vmem:[%s172 + $0xd00] sm:$0xff] %v369
        %825 = vst [vmem:[%s172 + $0xd08] sm:$0xff] %v371
        %826 = vst [vmem:[%s172 + $0xd10] sm:$0xff] %v373
        %827 = vst [vmem:[%s172 + $0xd18] sm:$0xff] %v375
        %828 = vst [vmem:[%s172 + $0xd20] sm:$0xff] %v377
        %829 = vst [vmem:[%s172 + $0xd28] sm:$0xff] %v379
        %830 = vst [vmem:[%s172 + $0xd30] sm:$0xff] %v381
        %831 = vst [vmem:[%s172 + $0xd38] sm:$0xff] %v383
        %832 = vst [vmem:[%s172 + $0xd40] sm:$0xff] %v385
        %833 = vst [vmem:[%s172 + $0xd48] sm:$0xff] %v387
        %834 = vst [vmem:[%s172 + $0xd50] sm:$0xff] %v389
        %835 = vst [vmem:[%s172 + $0xd58] sm:$0xff] %v391
        %836 = vst [vmem:[%s172 + $0xd60] sm:$0xff] %v393
        %837 = vst [vmem:[%s172 + $0xd68] sm:$0xff] %v395
        %838 = vst [vmem:[%s172 + $0xd70] sm:$0xff] %v397
        %839 = vst [vmem:[%s172 + $0xd78] sm:$0xff] %v399
        %840 = vst [vmem:[%s172 + $0xd80] sm:$0xff] %v401
        %841 = vst [vmem:[%s172 + $0xd88] sm:$0xff] %v403
        %842 = vst [vmem:[%s172 + $0xd90] sm:$0xff] %v405
        %843 = vst [vmem:[%s172 + $0xd98] sm:$0xff] %v407
        %844 = vst [vmem:[%s172 + $0xda0] sm:$0x1f] %v409
        %845 = vst [vmem:[%s172 + $0xda8] sm:$0x1f] %v411
        %846 = vst [vmem:[%s172 + $0xdb0] sm:$0x1f] %v413
        %847 = vst [vmem:[%s172 + $0xdb8] sm:$0x1f] %v415
        %848 = vst [vmem:[%s172 + $0xde0] sm:$0xfe] %v348
        %849 = vst [vmem:[%s172 + $0xde8] sm:$0xfe] %v349
        %850 = vst [vmem:[%s172 + $0xdf0] sm:$0xfe] %v350
        %851 = vst [vmem:[%s172 + $0xdf8] sm:$0xfe] %v351
        %852 = vst [vmem:[%s172 + $0xe00] sm:$0xff] %v353
        %853 = vst [vmem:[%s172 + $0xe08] sm:$0xff] %v355
        %854 = vst [vmem:[%s172 + $0xe10] sm:$0xff] %v357
        %855 = vst [vmem:[%s172 + $0xe18] sm:$0xff] %v359
        %856 = vst [vmem:[%s172 + $0xe20] sm:$0xff] %v361
        %857 = vst [vmem:[%s172 + $0xe28] sm:$0xff] %v363
        %858 = vst [vmem:[%s172 + $0xe30] sm:$0xff] %v365
        %859 = vst [vmem:[%s172 + $0xe38] sm:$0xff] %v367
        %860 = vst [vmem:[%s172 + $0xe40] sm:$0xff] %v369
        %861 = vst [vmem:[%s172 + $0xe48] sm:$0xff] %v371
        %862 = vst [vmem:[%s172 + $0xe50] sm:$0xff] %v373
        %863 = vst [vmem:[%s172 + $0xe58] sm:$0xff] %v375
        %864 = vst [vmem:[%s172 + $0xe60] sm:$0xff] %v377
        %865 = vst [vmem:[%s172 + $0xe68] sm:$0xff] %v379
        %866 = vst [vmem:[%s172 + $0xe70] sm:$0xff] %v381
        %867 = vst [vmem:[%s172 + $0xe78] sm:$0xff] %v383
        %868 = vst [vmem:[%s172 + $0xe80] sm:$0xff] %v385
        %869 = vst [vmem:[%s172 + $0xe88] sm:$0xff] %v387
        %870 = vst [vmem:[%s172 + $0xe90] sm:$0xff] %v389
        %871 = vst [vmem:[%s172 + $0xe98] sm:$0xff] %v391
        %872 = vst [vmem:[%s172 + $0xea0] sm:$0xff] %v393
        %873 = vst [vmem:[%s172 + $0xea8] sm:$0xff] %v395
        %874 = vst [vmem:[%s172 + $0xeb0] sm:$0xff] %v397
        %875 = vst [vmem:[%s172 + $0xeb8] sm:$0xff] %v399
        %876 = vst [vmem:[%s172 + $0xec0] sm:$0xff] %v401
        %877 = vst [vmem:[%s172 + $0xec8] sm:$0xff] %v403
        %878 = vst [vmem:[%s172 + $0xed0] sm:$0xff] %v405
        %879 = vst [vmem:[%s172 + $0xed8] sm:$0xff] %v407
        %880 = vst [vmem:[%s172 + $0xee0] sm:$0x1f] %v409
        %881 = vst [vmem:[%s172 + $0xee8] sm:$0x1f] %v411
        %882 = vst [vmem:[%s172 + $0xef0] sm:$0x1f] %v413
        %883 = vst [vmem:[%s172 + $0xef8] sm:$0x1f] %v415
        %884 = vst [vmem:[%s172 + $0xf20] sm:$0xfe] %v348
        %885 = vst [vmem:[%s172 + $0xf28] sm:$0xfe] %v349
        %886 = vst [vmem:[%s172 + $0xf30] sm:$0xfe] %v350
        %887 = vst [vmem:[%s172 + $0xf38] sm:$0xfe] %v351
        %888 = vst [vmem:[%s172 + $0xf40] sm:$0xff] %v353
        %889 = vst [vmem:[%s172 + $0xf48] sm:$0xff] %v355
        %890 = vst [vmem:[%s172 + $0xf50] sm:$0xff] %v357
        %891 = vst [vmem:[%s172 + $0xf58] sm:$0xff] %v359
        %892 = vst [vmem:[%s172 + $0xf60] sm:$0xff] %v361
        %893 = vst [vmem:[%s172 + $0xf68] sm:$0xff] %v363
        %894 = vst [vmem:[%s172 + $0xf70] sm:$0xff] %v365
        %895 = vst [vmem:[%s172 + $0xf78] sm:$0xff] %v367
        %896 = vst [vmem:[%s172 + $0xf80] sm:$0xff] %v369
        %897 = vst [vmem:[%s172 + $0xf88] sm:$0xff] %v371
        %898 = vst [vmem:[%s172 + $0xf90] sm:$0xff] %v373
        %899 = vst [vmem:[%s172 + $0xf98] sm:$0xff] %v375
        %900 = vst [vmem:[%s172 + $0xfa0] sm:$0xff] %v377
        %901 = vst [vmem:[%s172 + $0xfa8] sm:$0xff] %v379
        %902 = vst [vmem:[%s172 + $0xfb0] sm:$0xff] %v381
        %903 = vst [vmem:[%s172 + $0xfb8] sm:$0xff] %v383
        %904 = vst [vmem:[%s172 + $0xfc0] sm:$0xff] %v385
        %905 = vst [vmem:[%s172 + $0xfc8] sm:$0xff] %v387
        %906 = vst [vmem:[%s172 + $0xfd0] sm:$0xff] %v389
        %907 = vst [vmem:[%s172 + $0xfd8] sm:$0xff] %v391
        %908 = vst [vmem:[%s172 + $0xfe0] sm:$0xff] %v393
        %909 = vst [vmem:[%s172 + $0xfe8] sm:$0xff] %v395
        %910 = vst [vmem:[%s172 + $0xff0] sm:$0xff] %v397
        %911 = vst [vmem:[%s172 + $0xff8] sm:$0xff] %v399
        %912 = vst [vmem:[%s172 + $0x1000] sm:$0xff] %v401
        %913 = vst [vmem:[%s172 + $0x1008] sm:$0xff] %v403
        %914 = vst [vmem:[%s172 + $0x1010] sm:$0xff] %v405
        %915 = vst [vmem:[%s172 + $0x1018] sm:$0xff] %v407
        %916 = vst [vmem:[%s172 + $0x1020] sm:$0x1f] %v409
        %917 = vst [vmem:[%s172 + $0x1028] sm:$0x1f] %v411
        %918 = vst [vmem:[%s172 + $0x1030] sm:$0x1f] %v413
        %919 = vst [vmem:[%s172 + $0x1038] sm:$0x1f] %v415
        %920 = vst [vmem:[%s172 + $0x1060] sm:$0xfe] %v348
        %921 = vst [vmem:[%s172 + $0x1068] sm:$0xfe] %v349
        %922 = vst [vmem:[%s172 + $0x1070] sm:$0xfe] %v350
        %923 = vst [vmem:[%s172 + $0x1078] sm:$0xfe] %v351
        %924 = vst [vmem:[%s172 + $0x1080] sm:$0xff] %v353
        %925 = vst [vmem:[%s172 + $0x1088] sm:$0xff] %v355
        %926 = vst [vmem:[%s172 + $0x1090] sm:$0xff] %v357
        %927 = vst [vmem:[%s172 + $0x1098] sm:$0xff] %v359
        %928 = vst [vmem:[%s172 + $0x10a0] sm:$0xff] %v361
        %929 = vst [vmem:[%s172 + $0x10a8] sm:$0xff] %v363
        %930 = vst [vmem:[%s172 + $0x10b0] sm:$0xff] %v365
        %931 = vst [vmem:[%s172 + $0x10b8] sm:$0xff] %v367
        %932 = vst [vmem:[%s172 + $0x10c0] sm:$0xff] %v369
        %933 = vst [vmem:[%s172 + $0x10c8] sm:$0xff] %v371
        %934 = vst [vmem:[%s172 + $0x10d0] sm:$0xff] %v373
        %935 = vst [vmem:[%s172 + $0x10d8] sm:$0xff] %v375
        %936 = vst [vmem:[%s172 + $0x10e0] sm:$0xff] %v377
        %937 = vst [vmem:[%s172 + $0x10e8] sm:$0xff] %v379
        %938 = vst [vmem:[%s172 + $0x10f0] sm:$0xff] %v381
        %939 = vst [vmem:[%s172 + $0x10f8] sm:$0xff] %v383
        %940 = vst [vmem:[%s172 + $0x1100] sm:$0xff] %v385
        %941 = vst [vmem:[%s172 + $0x1108] sm:$0xff] %v387
        %942 = vst [vmem:[%s172 + $0x1110] sm:$0xff] %v389
        %943 = vst [vmem:[%s172 + $0x1118] sm:$0xff] %v391
        %944 = vst [vmem:[%s172 + $0x1120] sm:$0xff] %v393
        %945 = vst [vmem:[%s172 + $0x1128] sm:$0xff] %v395
        %946 = vst [vmem:[%s172 + $0x1130] sm:$0xff] %v397
        %947 = vst [vmem:[%s172 + $0x1138] sm:$0xff] %v399
        %948 = vst [vmem:[%s172 + $0x1140] sm:$0xff] %v401
        %949 = vst [vmem:[%s172 + $0x1148] sm:$0xff] %v403
        %950 = vst [vmem:[%s172 + $0x1150] sm:$0xff] %v405
        %951 = vst [vmem:[%s172 + $0x1158] sm:$0xff] %v407
        %952 = vst [vmem:[%s172 + $0x1160] sm:$0x1f] %v409
        %953 = vst [vmem:[%s172 + $0x1168] sm:$0x1f] %v411
        %954 = vst [vmem:[%s172 + $0x1170] sm:$0x1f] %v413
        %955 = vst [vmem:[%s172 + $0x1178] sm:$0x1f] %v415
        %956 = vst [vmem:[%s172 + $0x11a0] sm:$0xfe] %v348
        %957 = vst [vmem:[%s172 + $0x11a8] sm:$0xfe] %v349
        %958 = vst [vmem:[%s172 + $0x11b0] sm:$0xfe] %v350
        %959 = vst [vmem:[%s172 + $0x11b8] sm:$0xfe] %v351
        %960 = vst [vmem:[%s172 + $0x11c0] sm:$0xff] %v353
        %961 = vst [vmem:[%s172 + $0x11c8] sm:$0xff] %v355
        %962 = vst [vmem:[%s172 + $0x11d0] sm:$0xff] %v357
        %963 = vst [vmem:[%s172 + $0x11d8] sm:$0xff] %v359
        %964 = vst [vmem:[%s172 + $0x11e0] sm:$0xff] %v361
        %965 = vst [vmem:[%s172 + $0x11e8] sm:$0xff] %v363
        %966 = vst [vmem:[%s172 + $0x11f0] sm:$0xff] %v365
        %967 = vst [vmem:[%s172 + $0x11f8] sm:$0xff] %v367
        %968 = vst [vmem:[%s172 + $0x1200] sm:$0xff] %v369
        %969 = vst [vmem:[%s172 + $0x1208] sm:$0xff] %v371
        %970 = vst [vmem:[%s172 + $0x1210] sm:$0xff] %v373
        %971 = vst [vmem:[%s172 + $0x1218] sm:$0xff] %v375
        %972 = vst [vmem:[%s172 + $0x1220] sm:$0xff] %v377
        %973 = vst [vmem:[%s172 + $0x1228] sm:$0xff] %v379
        %974 = vst [vmem:[%s172 + $0x1230] sm:$0xff] %v381
        %975 = vst [vmem:[%s172 + $0x1238] sm:$0xff] %v383
        %976 = vst [vmem:[%s172 + $0x1240] sm:$0xff] %v385
        %977 = vst [vmem:[%s172 + $0x1248] sm:$0xff] %v387
        %978 = vst [vmem:[%s172 + $0x1250] sm:$0xff] %v389
        %979 = vst [vmem:[%s172 + $0x1258] sm:$0xff] %v391
        %980 = vst [vmem:[%s172 + $0x1260] sm:$0xff] %v393
        %981 = vst [vmem:[%s172 + $0x1268] sm:$0xff] %v395
        %982 = vst [vmem:[%s172 + $0x1270] sm:$0xff] %v397
        %983 = vst [vmem:[%s172 + $0x1278] sm:$0xff] %v399
        %984 = vst [vmem:[%s172 + $0x1280] sm:$0xff] %v401
        %985 = vst [vmem:[%s172 + $0x1288] sm:$0xff] %v403
        %986 = vst [vmem:[%s172 + $0x1290] sm:$0xff] %v405
        %987 = vst [vmem:[%s172 + $0x1298] sm:$0xff] %v407
        %988 = vst [vmem:[%s172 + $0x12a0] sm:$0x1f] %v409
        %989 = vst [vmem:[%s172 + $0x12a8] sm:$0x1f] %v411
        %990 = vst [vmem:[%s172 + $0x12b0] sm:$0x1f] %v413
        %991 = vst [vmem:[%s172 + $0x12b8] sm:$0x1f] %v415
        %992 = vst [vmem:[%s172 + $0x12e0] sm:$0xfe] %v348
        %993 = vst [vmem:[%s172 + $0x12e8] sm:$0xfe] %v349
        %994 = vst [vmem:[%s172 + $0x12f0] sm:$0xfe] %v350
        %995 = vst [vmem:[%s172 + $0x12f8] sm:$0xfe] %v351
        %996 = vst [vmem:[%s172 + $0x1300] sm:$0xff] %v353
        %997 = vst [vmem:[%s172 + $0x1308] sm:$0xff] %v355
        %998 = vst [vmem:[%s172 + $0x1310] sm:$0xff] %v357
        %999 = vst [vmem:[%s172 + $0x1318] sm:$0xff] %v359
        %1000 = vst [vmem:[%s172 + $0x1320] sm:$0xff] %v361
        %1001 = vst [vmem:[%s172 + $0x1328] sm:$0xff] %v363
        %1002 = vst [vmem:[%s172 + $0x1330] sm:$0xff] %v365
        %1003 = vst [vmem:[%s172 + $0x1338] sm:$0xff] %v367
        %1004 = vst [vmem:[%s172 + $0x1340] sm:$0xff] %v369
        %1005 = vst [vmem:[%s172 + $0x1348] sm:$0xff] %v371
        %1006 = vst [vmem:[%s172 + $0x1350] sm:$0xff] %v373
        %1007 = vst [vmem:[%s172 + $0x1358] sm:$0xff] %v375
        %1008 = vst [vmem:[%s172 + $0x1360] sm:$0xff] %v377
        %1009 = vst [vmem:[%s172 + $0x1368] sm:$0xff] %v379
        %1010 = vst [vmem:[%s172 + $0x1370] sm:$0xff] %v381
        %1011 = vst [vmem:[%s172 + $0x1378] sm:$0xff] %v383
        %1012 = vst [vmem:[%s172 + $0x1380] sm:$0xff] %v385
        %1013 = vst [vmem:[%s172 + $0x1388] sm:$0xff] %v387
        %1014 = vst [vmem:[%s172 + $0x1390] sm:$0xff] %v389
        %1015 = vst [vmem:[%s172 + $0x1398] sm:$0xff] %v391
        %1016 = vst [vmem:[%s172 + $0x13a0] sm:$0xff] %v393
        %1017 = vst [vmem:[%s172 + $0x13a8] sm:$0xff] %v395
        %1018 = vst [vmem:[%s172 + $0x13b0] sm:$0xff] %v397
        %1019 = vst [vmem:[%s172 + $0x13b8] sm:$0xff] %v399
        %1020 = vst [vmem:[%s172 + $0x13c0] sm:$0xff] %v401
        %1021 = vst [vmem:[%s172 + $0x13c8] sm:$0xff] %v403
        %1022 = vst [vmem:[%s172 + $0x13d0] sm:$0xff] %v405
        %1023 = vst [vmem:[%s172 + $0x13d8] sm:$0xff] %v407
        %1024 = vst [vmem:[%s172 + $0x13e0] sm:$0x1f] %v409
        %1025 = vst [vmem:[%s172 + $0x13e8] sm:$0x1f] %v411
        %1026 = vst [vmem:[%s172 + $0x13f0] sm:$0x1f] %v413
        %1027 = vst [vmem:[%s172 + $0x13f8] sm:$0x1f] %v415
        %1028 = vst [vmem:[%s172 + $0x1420] sm:$0xfe] %v348
        %1029 = vst [vmem:[%s172 + $0x1428] sm:$0xfe] %v349
        %1030 = vst [vmem:[%s172 + $0x1430] sm:$0xfe] %v350
        %1031 = vst [vmem:[%s172 + $0x1438] sm:$0xfe] %v351
        %1032 = vst [vmem:[%s172 + $0x1440] sm:$0xff] %v353
        %1033 = vst [vmem:[%s172 + $0x1448] sm:$0xff] %v355
        %1034 = vst [vmem:[%s172 + $0x1450] sm:$0xff] %v357
        %1035 = vst [vmem:[%s172 + $0x1458] sm:$0xff] %v359
        %1036 = vst [vmem:[%s172 + $0x1460] sm:$0xff] %v361
        %1037 = vst [vmem:[%s172 + $0x1468] sm:$0xff] %v363
        %1038 = vst [vmem:[%s172 + $0x1470] sm:$0xff] %v365
        %1039 = vst [vmem:[%s172 + $0x1478] sm:$0xff] %v367
        %1040 = vst [vmem:[%s172 + $0x1480] sm:$0xff] %v369
        %1041 = vst [vmem:[%s172 + $0x1488] sm:$0xff] %v371
        %1042 = vst [vmem:[%s172 + $0x1490] sm:$0xff] %v373
        %1043 = vst [vmem:[%s172 + $0x1498] sm:$0xff] %v375
        %1044 = vst [vmem:[%s172 + $0x14a0] sm:$0xff] %v377
        %1045 = vst [vmem:[%s172 + $0x14a8] sm:$0xff] %v379
        %1046 = vst [vmem:[%s172 + $0x14b0] sm:$0xff] %v381
        %1047 = vst [vmem:[%s172 + $0x14b8] sm:$0xff] %v383
        %1048 = vst [vmem:[%s172 + $0x14c0] sm:$0xff] %v385
        %1049 = vst [vmem:[%s172 + $0x14c8] sm:$0xff] %v387
        %1050 = vst [vmem:[%s172 + $0x14d0] sm:$0xff] %v389
        %1051 = vst [vmem:[%s172 + $0x14d8] sm:$0xff] %v391
        %1052 = vst [vmem:[%s172 + $0x14e0] sm:$0xff] %v393
        %1053 = vst [vmem:[%s172 + $0x14e8] sm:$0xff] %v395
        %1054 = vst [vmem:[%s172 + $0x14f0] sm:$0xff] %v397
        %1055 = vst [vmem:[%s172 + $0x14f8] sm:$0xff] %v399
        %1056 = vst [vmem:[%s172 + $0x1500] sm:$0xff] %v401
        %1057 = vst [vmem:[%s172 + $0x1508] sm:$0xff] %v403
        %1058 = vst [vmem:[%s172 + $0x1510] sm:$0xff] %v405
        %1059 = vst [vmem:[%s172 + $0x1518] sm:$0xff] %v407
        %1060 = vst [vmem:[%s172 + $0x1520] sm:$0x1f] %v409
        %1061 = vst [vmem:[%s172 + $0x1528] sm:$0x1f] %v411
        %1062 = vst [vmem:[%s172 + $0x1530] sm:$0x1f] %v413
        %1063 = vst [vmem:[%s172 + $0x1538] sm:$0x1f] %v415
        %1064 = vst [vmem:[%s172 + $0x1560] sm:$0xfe] %v348
        %1065 = vst [vmem:[%s172 + $0x1568] sm:$0xfe] %v349
        %1066 = vst [vmem:[%s172 + $0x1570] sm:$0xfe] %v350
        %1067 = vst [vmem:[%s172 + $0x1578] sm:$0xfe] %v351
        %1068 = vst [vmem:[%s172 + $0x1580] sm:$0xff] %v353
        %1069 = vst [vmem:[%s172 + $0x1588] sm:$0xff] %v355
        %1070 = vst [vmem:[%s172 + $0x1590] sm:$0xff] %v357
        %1071 = vst [vmem:[%s172 + $0x1598] sm:$0xff] %v359
        %1072 = vst [vmem:[%s172 + $0x15a0] sm:$0xff] %v361
        %1073 = vst [vmem:[%s172 + $0x15a8] sm:$0xff] %v363
        %1074 = vst [vmem:[%s172 + $0x15b0] sm:$0xff] %v365
        %1075 = vst [vmem:[%s172 + $0x15b8] sm:$0xff] %v367
        %1076 = vst [vmem:[%s172 + $0x15c0] sm:$0xff] %v369
        %1077 = vst [vmem:[%s172 + $0x15c8] sm:$0xff] %v371
        %1078 = vst [vmem:[%s172 + $0x15d0] sm:$0xff] %v373
        %1079 = vst [vmem:[%s172 + $0x15d8] sm:$0xff] %v375
        %1080 = vst [vmem:[%s172 + $0x15e0] sm:$0xff] %v377
        %1081 = vst [vmem:[%s172 + $0x15e8] sm:$0xff] %v379
        %1082 = vst [vmem:[%s172 + $0x15f0] sm:$0xff] %v381
        %1083 = vst [vmem:[%s172 + $0x15f8] sm:$0xff] %v383
        %1084 = vst [vmem:[%s172 + $0x1600] sm:$0xff] %v385
        %1085 = vst [vmem:[%s172 + $0x1608] sm:$0xff] %v387
        %1086 = vst [vmem:[%s172 + $0x1610] sm:$0xff] %v389
        %1087 = vst [vmem:[%s172 + $0x1618] sm:$0xff] %v391
        %1088 = vst [vmem:[%s172 + $0x1620] sm:$0xff] %v393
        %1089 = vst [vmem:[%s172 + $0x1628] sm:$0xff] %v395
        %1090 = vst [vmem:[%s172 + $0x1630] sm:$0xff] %v397
        %1091 = vst [vmem:[%s172 + $0x1638] sm:$0xff] %v399
        %1092 = vst [vmem:[%s172 + $0x1640] sm:$0xff] %v401
        %1093 = vst [vmem:[%s172 + $0x1648] sm:$0xff] %v403
        %1094 = vst [vmem:[%s172 + $0x1650] sm:$0xff] %v405
        %1095 = vst [vmem:[%s172 + $0x1658] sm:$0xff] %v407
        %1096 = vst [vmem:[%s172 + $0x1660] sm:$0x1f] %v409
        %1097 = vst [vmem:[%s172 + $0x1668] sm:$0x1f] %v411
        %1098 = vst [vmem:[%s172 + $0x1670] sm:$0x1f] %v413
        %1099 = vst [vmem:[%s172 + $0x1678] sm:$0x1f] %v415
        %1100 = vst [vmem:[%s172 + $0x16a0] sm:$0xfe] %v348
        %1101 = vst [vmem:[%s172 + $0x16a8] sm:$0xfe] %v349
        %1102 = vst [vmem:[%s172 + $0x16b0] sm:$0xfe] %v350
        %1103 = vst [vmem:[%s172 + $0x16b8] sm:$0xfe] %v351
        %1104 = vst [vmem:[%s172 + $0x16c0] sm:$0xff] %v353
        %1105 = vst [vmem:[%s172 + $0x16c8] sm:$0xff] %v355
        %1106 = vst [vmem:[%s172 + $0x16d0] sm:$0xff] %v357
        %1107 = vst [vmem:[%s172 + $0x16d8] sm:$0xff] %v359
        %1108 = vst [vmem:[%s172 + $0x16e0] sm:$0xff] %v361
        %1109 = vst [vmem:[%s172 + $0x16e8] sm:$0xff] %v363
        %1110 = vst [vmem:[%s172 + $0x16f0] sm:$0xff] %v365
        %1111 = vst [vmem:[%s172 + $0x16f8] sm:$0xff] %v367
        %1112 = vst [vmem:[%s172 + $0x1700] sm:$0xff] %v369
        %1113 = vst [vmem:[%s172 + $0x1708] sm:$0xff] %v371
        %1114 = vst [vmem:[%s172 + $0x1710] sm:$0xff] %v373
        %1115 = vst [vmem:[%s172 + $0x1718] sm:$0xff] %v375
        %1116 = vst [vmem:[%s172 + $0x1720] sm:$0xff] %v377
        %1117 = vst [vmem:[%s172 + $0x1728] sm:$0xff] %v379
        %1118 = vst [vmem:[%s172 + $0x1730] sm:$0xff] %v381
        %1119 = vst [vmem:[%s172 + $0x1738] sm:$0xff] %v383
        %1120 = vst [vmem:[%s172 + $0x1740] sm:$0xff] %v385
        %1121 = vst [vmem:[%s172 + $0x1748] sm:$0xff] %v387
        %1122 = vst [vmem:[%s172 + $0x1750] sm:$0xff] %v389
        %1123 = vst [vmem:[%s172 + $0x1758] sm:$0xff] %v391
        %1124 = vst [vmem:[%s172 + $0x1760] sm:$0xff] %v393
        %1125 = vst [vmem:[%s172 + $0x1768] sm:$0xff] %v395
        %1126 = vst [vmem:[%s172 + $0x1770] sm:$0xff] %v397
        %1127 = vst [vmem:[%s172 + $0x1778] sm:$0xff] %v399
        %1128 = vst [vmem:[%s172 + $0x1780] sm:$0xff] %v401
        %1129 = vst [vmem:[%s172 + $0x1788] sm:$0xff] %v403
        %1130 = vst [vmem:[%s172 + $0x1790] sm:$0xff] %v405
        %1131 = vst [vmem:[%s172 + $0x1798] sm:$0xff] %v407
        %1132 = vst [vmem:[%s172 + $0x17a0] sm:$0x1f] %v409
        %1133 = vst [vmem:[%s172 + $0x17a8] sm:$0x1f] %v411
        %1134 = vst [vmem:[%s172 + $0x17b0] sm:$0x1f] %v413
        %1135 = vst [vmem:[%s172 + $0x17b8] sm:$0x1f] %v415
        %1136 = vst [vmem:[%s172 + $0x17e0] sm:$0xfe] %v348
        %1137 = vst [vmem:[%s172 + $0x17e8] sm:$0xfe] %v349
        %1138 = vst [vmem:[%s172 + $0x17f0] sm:$0xfe] %v350
        %1139 = vst [vmem:[%s172 + $0x17f8] sm:$0xfe] %v351
        %1140 = vst [vmem:[%s172 + $0x1800] sm:$0xff] %v353
        %1141 = vst [vmem:[%s172 + $0x1808] sm:$0xff] %v355
        %1142 = vst [vmem:[%s172 + $0x1810] sm:$0xff] %v357
        %1143 = vst [vmem:[%s172 + $0x1818] sm:$0xff] %v359
        %1144 = vst [vmem:[%s172 + $0x1820] sm:$0xff] %v361
        %1145 = vst [vmem:[%s172 + $0x1828] sm:$0xff] %v363
        %1146 = vst [vmem:[%s172 + $0x1830] sm:$0xff] %v365
        %1147 = vst [vmem:[%s172 + $0x1838] sm:$0xff] %v367
        %1148 = vst [vmem:[%s172 + $0x1840] sm:$0xff] %v369
        %1149 = vst [vmem:[%s172 + $0x1848] sm:$0xff] %v371
        %1150 = vst [vmem:[%s172 + $0x1850] sm:$0xff] %v373
        %1151 = vst [vmem:[%s172 + $0x1858] sm:$0xff] %v375
        %1152 = vst [vmem:[%s172 + $0x1860] sm:$0xff] %v377
        %1153 = vst [vmem:[%s172 + $0x1868] sm:$0xff] %v379
        %1154 = vst [vmem:[%s172 + $0x1870] sm:$0xff] %v381
        %1155 = vst [vmem:[%s172 + $0x1878] sm:$0xff] %v383
        %1156 = vst [vmem:[%s172 + $0x1880] sm:$0xff] %v385
        %1157 = vst [vmem:[%s172 + $0x1888] sm:$0xff] %v387
        %1158 = vst [vmem:[%s172 + $0x1890] sm:$0xff] %v389
        %1159 = vst [vmem:[%s172 + $0x1898] sm:$0xff] %v391
        %1160 = vst [vmem:[%s172 + $0x18a0] sm:$0xff] %v393
        %1161 = vst [vmem:[%s172 + $0x18a8] sm:$0xff] %v395
        %1162 = vst [vmem:[%s172 + $0x18b0] sm:$0xff] %v397
        %1163 = vst [vmem:[%s172 + $0x18b8] sm:$0xff] %v399
        %1164 = vst [vmem:[%s172 + $0x18c0] sm:$0xff] %v401
        %1165 = vst [vmem:[%s172 + $0x18c8] sm:$0xff] %v403
        %1166 = vst [vmem:[%s172 + $0x18d0] sm:$0xff] %v405
        %1167 = vst [vmem:[%s172 + $0x18d8] sm:$0xff] %v407
        %1168 = vst [vmem:[%s172 + $0x18e0] sm:$0x1f] %v409
        %1169 = vst [vmem:[%s172 + $0x18e8] sm:$0x1f] %v411
        %1170 = vst [vmem:[%s172 + $0x18f0] sm:$0x1f] %v413
        %1171 = vst [vmem:[%s172 + $0x18f8] sm:$0x1f] %v415
        %1172 = vst [vmem:[%s172 + $0x1920] sm:$0xfe] %v348
        %1173 = vst [vmem:[%s172 + $0x1928] sm:$0xfe] %v349
        %1174 = vst [vmem:[%s172 + $0x1930] sm:$0xfe] %v350
        %1175 = vst [vmem:[%s172 + $0x1938] sm:$0xfe] %v351
        %1176 = vst [vmem:[%s172 + $0x1940] sm:$0xff] %v353
        %1177 = vst [vmem:[%s172 + $0x1948] sm:$0xff] %v355
        %1178 = vst [vmem:[%s172 + $0x1950] sm:$0xff] %v357
        %1179 = vst [vmem:[%s172 + $0x1958] sm:$0xff] %v359
        %1180 = vst [vmem:[%s172 + $0x1960] sm:$0xff] %v361
        %1181 = vst [vmem:[%s172 + $0x1968] sm:$0xff] %v363
        %1182 = vst [vmem:[%s172 + $0x1970] sm:$0xff] %v365
        %1183 = vst [vmem:[%s172 + $0x1978] sm:$0xff] %v367
        %1184 = vst [vmem:[%s172 + $0x1980] sm:$0xff] %v369
        %1185 = vst [vmem:[%s172 + $0x1988] sm:$0xff] %v371
        %1186 = vst [vmem:[%s172 + $0x1990] sm:$0xff] %v373
        %1187 = vst [vmem:[%s172 + $0x1998] sm:$0xff] %v375
        %1188 = vst [vmem:[%s172 + $0x19a0] sm:$0xff] %v377
        %1189 = vst [vmem:[%s172 + $0x19a8] sm:$0xff] %v379
        %1190 = vst [vmem:[%s172 + $0x19b0] sm:$0xff] %v381
        %1191 = vst [vmem:[%s172 + $0x19b8] sm:$0xff] %v383
        %1192 = vst [vmem:[%s172 + $0x19c0] sm:$0xff] %v385
        %1193 = vst [vmem:[%s172 + $0x19c8] sm:$0xff] %v387
        %1194 = vst [vmem:[%s172 + $0x19d0] sm:$0xff] %v389
        %1195 = vst [vmem:[%s172 + $0x19d8] sm:$0xff] %v391
        %1196 = vst [vmem:[%s172 + $0x19e0] sm:$0xff] %v393
        %1197 = vst [vmem:[%s172 + $0x19e8] sm:$0xff] %v395
        %1198 = vst [vmem:[%s172 + $0x19f0] sm:$0xff] %v397
        %1199 = vst [vmem:[%s172 + $0x19f8] sm:$0xff] %v399
        %1200 = vst [vmem:[%s172 + $0x1a00] sm:$0xff] %v401
        %1201 = vst [vmem:[%s172 + $0x1a08] sm:$0xff] %v403
        %1202 = vst [vmem:[%s172 + $0x1a10] sm:$0xff] %v405
        %1203 = vst [vmem:[%s172 + $0x1a18] sm:$0xff] %v407
        %1204 = vst [vmem:[%s172 + $0x1a20] sm:$0x1f] %v409
        %1205 = vst [vmem:[%s172 + $0x1a28] sm:$0x1f] %v411
        %1206 = vst [vmem:[%s172 + $0x1a30] sm:$0x1f] %v413
        %1207 = vst [vmem:[%s172 + $0x1a38] sm:$0x1f] %v415
        %1208 = vst [vmem:[%s172 + $0x1a60] sm:$0xfe] %v348
        %1209 = vst [vmem:[%s172 + $0x1a68] sm:$0xfe] %v349
        %1210 = vst [vmem:[%s172 + $0x1a70] sm:$0xfe] %v350
        %1211 = vst [vmem:[%s172 + $0x1a78] sm:$0xfe] %v351
        %1212 = vst [vmem:[%s172 + $0x1a80] sm:$0xff] %v353
        %1213 = vst [vmem:[%s172 + $0x1a88] sm:$0xff] %v355
        %1214 = vst [vmem:[%s172 + $0x1a90] sm:$0xff] %v357
        %1215 = vst [vmem:[%s172 + $0x1a98] sm:$0xff] %v359
        %1216 = vst [vmem:[%s172 + $0x1aa0] sm:$0xff] %v361
        %1217 = vst [vmem:[%s172 + $0x1aa8] sm:$0xff] %v363
        %1218 = vst [vmem:[%s172 + $0x1ab0] sm:$0xff] %v365
        %1219 = vst [vmem:[%s172 + $0x1ab8] sm:$0xff] %v367
        %1220 = vst [vmem:[%s172 + $0x1ac0] sm:$0xff] %v369
        %1221 = vst [vmem:[%s172 + $0x1ac8] sm:$0xff] %v371
        %1222 = vst [vmem:[%s172 + $0x1ad0] sm:$0xff] %v373
        %1223 = vst [vmem:[%s172 + $0x1ad8] sm:$0xff] %v375
        %1224 = vst [vmem:[%s172 + $0x1ae0] sm:$0xff] %v377
        %1225 = vst [vmem:[%s172 + $0x1ae8] sm:$0xff] %v379
        %1226 = vst [vmem:[%s172 + $0x1af0] sm:$0xff] %v381
        %1227 = vst [vmem:[%s172 + $0x1af8] sm:$0xff] %v383
        %1228 = vst [vmem:[%s172 + $0x1b00] sm:$0xff] %v385
        %1229 = vst [vmem:[%s172 + $0x1b08] sm:$0xff] %v387
        %1230 = vst [vmem:[%s172 + $0x1b10] sm:$0xff] %v389
        %1231 = vst [vmem:[%s172 + $0x1b18] sm:$0xff] %v391
        %1232 = vst [vmem:[%s172 + $0x1b20] sm:$0xff] %v393
        %1233 = vst [vmem:[%s172 + $0x1b28] sm:$0xff] %v395
        %1234 = vst [vmem:[%s172 + $0x1b30] sm:$0xff] %v397
        %1235 = vst [vmem:[%s172 + $0x1b38] sm:$0xff] %v399
        %1236 = vst [vmem:[%s172 + $0x1b40] sm:$0xff] %v401
        %1237 = vst [vmem:[%s172 + $0x1b48] sm:$0xff] %v403
        %1238 = vst [vmem:[%s172 + $0x1b50] sm:$0xff] %v405
        %1239 = vst [vmem:[%s172 + $0x1b58] sm:$0xff] %v407
        %1240 = vst [vmem:[%s172 + $0x1b60] sm:$0x1f] %v409
        %1241 = vst [vmem:[%s172 + $0x1b68] sm:$0x1f] %v411
        %1242 = vst [vmem:[%s172 + $0x1b70] sm:$0x1f] %v413
        %1243 = vst [vmem:[%s172 + $0x1b78] sm:$0x1f] %v415
        %1244 = vst [vmem:[%s172 + $0x1ba0] sm:$0xfe] %v348
        %1245 = vst [vmem:[%s172 + $0x1ba8] sm:$0xfe] %v349
        %1246 = vst [vmem:[%s172 + $0x1bb0] sm:$0xfe] %v350
        %1247 = vst [vmem:[%s172 + $0x1bb8] sm:$0xfe] %v351
        %1248 = vst [vmem:[%s172 + $0x1bc0] sm:$0xff] %v353
        %1249 = vst [vmem:[%s172 + $0x1bc8] sm:$0xff] %v355
        %1250 = vst [vmem:[%s172 + $0x1bd0] sm:$0xff] %v357
        %1251 = vst [vmem:[%s172 + $0x1bd8] sm:$0xff] %v359
        %1252 = vst [vmem:[%s172 + $0x1be0] sm:$0xff] %v361
        %1253 = vst [vmem:[%s172 + $0x1be8] sm:$0xff] %v363
        %1254 = vst [vmem:[%s172 + $0x1bf0] sm:$0xff] %v365
        %1255 = vst [vmem:[%s172 + $0x1bf8] sm:$0xff] %v367
        %1256 = vst [vmem:[%s172 + $0x1c00] sm:$0xff] %v369
        %1257 = vst [vmem:[%s172 + $0x1c08] sm:$0xff] %v371
        %1258 = vst [vmem:[%s172 + $0x1c10] sm:$0xff] %v373
        %1259 = vst [vmem:[%s172 + $0x1c18] sm:$0xff] %v375
        %1260 = vst [vmem:[%s172 + $0x1c20] sm:$0xff] %v377
        %1261 = vst [vmem:[%s172 + $0x1c28] sm:$0xff] %v379
        %1262 = vst [vmem:[%s172 + $0x1c30] sm:$0xff] %v381
        %1263 = vst [vmem:[%s172 + $0x1c38] sm:$0xff] %v383
        %1264 = vst [vmem:[%s172 + $0x1c40] sm:$0xff] %v385
        %1265 = vst [vmem:[%s172 + $0x1c48] sm:$0xff] %v387
        %1266 = vst [vmem:[%s172 + $0x1c50] sm:$0xff] %v389
        %1267 = vst [vmem:[%s172 + $0x1c58] sm:$0xff] %v391
        %1268 = vst [vmem:[%s172 + $0x1c60] sm:$0xff] %v393
        %1269 = vst [vmem:[%s172 + $0x1c68] sm:$0xff] %v395
        %1270 = vst [vmem:[%s172 + $0x1c70] sm:$0xff] %v397
        %1271 = vst [vmem:[%s172 + $0x1c78] sm:$0xff] %v399
        %1272 = vst [vmem:[%s172 + $0x1c80] sm:$0xff] %v401
        %1273 = vst [vmem:[%s172 + $0x1c88] sm:$0xff] %v403
        %1274 = vst [vmem:[%s172 + $0x1c90] sm:$0xff] %v405
        %1275 = vst [vmem:[%s172 + $0x1c98] sm:$0xff] %v407
        %1276 = vst [vmem:[%s172 + $0x1ca0] sm:$0x1f] %v409
        %1277 = vst [vmem:[%s172 + $0x1ca8] sm:$0x1f] %v411
        %1278 = vst [vmem:[%s172 + $0x1cb0] sm:$0x1f] %v413
        %1279 = vst [vmem:[%s172 + $0x1cb8] sm:$0x1f] %v415
        %1280 = vst [vmem:[%s172 + $0x1ce0] sm:$0xfe] %v348
        %1281 = vst [vmem:[%s172 + $0x1ce8] sm:$0xfe] %v349
        %1282 = vst [vmem:[%s172 + $0x1cf0] sm:$0xfe] %v350
        %1283 = vst [vmem:[%s172 + $0x1cf8] sm:$0xfe] %v351
        %1284 = vst [vmem:[%s172 + $0x1d00] sm:$0xff] %v353
        %1285 = vst [vmem:[%s172 + $0x1d08] sm:$0xff] %v355
        %1286 = vst [vmem:[%s172 + $0x1d10] sm:$0xff] %v357
        %1287 = vst [vmem:[%s172 + $0x1d18] sm:$0xff] %v359
        %1288 = vst [vmem:[%s172 + $0x1d20] sm:$0xff] %v361
        %1289 = vst [vmem:[%s172 + $0x1d28] sm:$0xff] %v363
        %1290 = vst [vmem:[%s172 + $0x1d30] sm:$0xff] %v365
        %1291 = vst [vmem:[%s172 + $0x1d38] sm:$0xff] %v367
        %1292 = vst [vmem:[%s172 + $0x1d40] sm:$0xff] %v369
        %1293 = vst [vmem:[%s172 + $0x1d48] sm:$0xff] %v371
        %1294 = vst [vmem:[%s172 + $0x1d50] sm:$0xff] %v373
        %1295 = vst [vmem:[%s172 + $0x1d58] sm:$0xff] %v375
        %1296 = vst [vmem:[%s172 + $0x1d60] sm:$0xff] %v377
        %1297 = vst [vmem:[%s172 + $0x1d68] sm:$0xff] %v379
        %1298 = vst [vmem:[%s172 + $0x1d70] sm:$0xff] %v381
        %1299 = vst [vmem:[%s172 + $0x1d78] sm:$0xff] %v383
        %1300 = vst [vmem:[%s172 + $0x1d80] sm:$0xff] %v385
        %1301 = vst [vmem:[%s172 + $0x1d88] sm:$0xff] %v387
        %1302 = vst [vmem:[%s172 + $0x1d90] sm:$0xff] %v389
        %1303 = vst [vmem:[%s172 + $0x1d98] sm:$0xff] %v391
        %1304 = vst [vmem:[%s172 + $0x1da0] sm:$0xff] %v393
        %1305 = vst [vmem:[%s172 + $0x1da8] sm:$0xff] %v395
        %1306 = vst [vmem:[%s172 + $0x1db0] sm:$0xff] %v397
        %1307 = vst [vmem:[%s172 + $0x1db8] sm:$0xff] %v399
        %1308 = vst [vmem:[%s172 + $0x1dc0] sm:$0xff] %v401
        %1309 = vst [vmem:[%s172 + $0x1dc8] sm:$0xff] %v403
        %1310 = vst [vmem:[%s172 + $0x1dd0] sm:$0xff] %v405
        %1311 = vst [vmem:[%s172 + $0x1dd8] sm:$0xff] %v407
        %1312 = vst [vmem:[%s172 + $0x1de0] sm:$0x1f] %v409
        %1313 = vst [vmem:[%s172 + $0x1de8] sm:$0x1f] %v411
        %1314 = vst [vmem:[%s172 + $0x1df0] sm:$0x1f] %v413
        %1315 = vst [vmem:[%s172 + $0x1df8] sm:$0x1f] %v415
        %s1316 = sld [smem:[#allocation3 + %s174]]
        %s1317 = smul.u32 %s1316, 4
        %s1318 = smul.addr %s1317, 4
        %s1319 = scalar_lea.vmem [#allocation4], %s1318
        %v1320 = vld [vmem:[%s1319] sm:$0xff]
        %v1321 = vld [vmem:[%s1319 + $0x8] sm:$0xff]
        %v1324 = vcombine.high %v1320, %v1320
        %v1325 = vcombine.high %v1321, %v1321
        %v1326 = vrot.slane %v1320, 3
        %v1327 = vrot.slane %v1324, 3
        %v1328 = vrot.slane %v1321, 3
        %v1329 = vrot.slane %v1325, 3
        %1334 = vst [vmem:[%s172] sm:$0xe0] %v1326
        %1335 = vst [vmem:[%s172 + $0x8] sm:$0xe0] %v1327
        %1336 = vst [vmem:[%s172 + $0x10] sm:$0xe0] %v1328
        %1337 = vst [vmem:[%s172 + $0x18] sm:$0xe0] %v1329
        %1338 = vst [vmem:[%s172 + $0x20] sm:$0x1] %v1326
        %1339 = vst [vmem:[%s172 + $0x28] sm:$0x1] %v1327
        %1340 = vst [vmem:[%s172 + $0x30] sm:$0x1] %v1328
        %1341 = vst [vmem:[%s172 + $0x38] sm:$0x1] %v1329
        %s1342 = sadd.s32 %s174, 1
        %s1343 = sld [smem:[#allocation3 + %s1342]]
        %s1344 = smul.u32 %s1343, 4
        %s1345 = smul.addr %s1344, 4
        %s1346 = scalar_lea.vmem [#allocation4], %s1345
        %v1347 = vld [vmem:[%s1346] sm:$0xff]
        %v1348 = vld [vmem:[%s1346 + $0x8] sm:$0xff]
        %v1351 = vcombine.high %v1347, %v1347
        %v1352 = vcombine.high %v1348, %v1348
        %v1353 = vrot.slane %v1347, 3
        %v1354 = vrot.slane %v1351, 3
        %v1355 = vrot.slane %v1348, 3
        %v1356 = vrot.slane %v1352, 3
        %s1361 = scalar_lea.vmem %s172, 320
        %1362 = vst [vmem:[%s1361] sm:$0xe0] %v1353
        %1363 = vst [vmem:[%s1361 + $0x8] sm:$0xe0] %v1354
        %1364 = vst [vmem:[%s1361 + $0x10] sm:$0xe0] %v1355
        %1365 = vst [vmem:[%s1361 + $0x18] sm:$0xe0] %v1356
        %1366 = vst [vmem:[%s1361 + $0x20] sm:$0x1] %v1353
        %1367 = vst [vmem:[%s1361 + $0x28] sm:$0x1] %v1354
        %1368 = vst [vmem:[%s1361 + $0x30] sm:$0x1] %v1355
        %1369 = vst [vmem:[%s1361 + $0x38] sm:$0x1] %v1356
        %s1370 = sadd.s32 %s174, 2
        %s1371 = sld [smem:[#allocation3 + %s1370]]
        %s1372 = smul.u32 %s1371, 4
        %s1373 = smul.addr %s1372, 4
        %s1374 = scalar_lea.vmem [#allocation4], %s1373
        %v1375 = vld [vmem:[%s1374] sm:$0xff]
        %v1376 = vld [vmem:[%s1374 + $0x8] sm:$0xff]
        %v1379 = vcombine.high %v1375, %v1375
        %v1380 = vcombine.high %v1376, %v1376
        %v1381 = vrot.slane %v1375, 3
        %v1382 = vrot.slane %v1379, 3
        %v1383 = vrot.slane %v1376, 3
        %v1384 = vrot.slane %v1380, 3
        %s1389 = scalar_lea.vmem %s172, 640
        %1390 = vst [vmem:[%s1389] sm:$0xe0] %v1381
        %1391 = vst [vmem:[%s1389 + $0x8] sm:$0xe0] %v1382
        %1392 = vst [vmem:[%s1389 + $0x10] sm:$0xe0] %v1383
        %1393 = vst [vmem:[%s1389 + $0x18] sm:$0xe0] %v1384
        %1394 = vst [vmem:[%s1389 + $0x20] sm:$0x1] %v1381
        %1395 = vst [vmem:[%s1389 + $0x28] sm:$0x1] %v1382
        %1396 = vst [vmem:[%s1389 + $0x30] sm:$0x1] %v1383
        %1397 = vst [vmem:[%s1389 + $0x38] sm:$0x1] %v1384
        %s1398 = sadd.s32 %s174, 3
        %s1399 = sld [smem:[#allocation3 + %s1398]]
        %s1400 = smul.u32 %s1399, 4
        %s1401 = smul.addr %s1400, 4
        %s1402 = scalar_lea.vmem [#allocation4], %s1401
        %v1403 = vld [vmem:[%s1402] sm:$0xff]
        %v1404 = vld [vmem:[%s1402 + $0x8] sm:$0xff]
        %v1407 = vcombine.high %v1403, %v1403
        %v1408 = vcombine.high %v1404, %v1404
        %v1409 = vrot.slane %v1403, 3
        %v1410 = vrot.slane %v1407, 3
        %v1411 = vrot.slane %v1404, 3
        %v1412 = vrot.slane %v1408, 3
        %s1417 = scalar_lea.vmem %s172, 960
        %1418 = vst [vmem:[%s1417] sm:$0xe0] %v1409
        %1419 = vst [vmem:[%s1417 + $0x8] sm:$0xe0] %v1410
        %1420 = vst [vmem:[%s1417 + $0x10] sm:$0xe0] %v1411
        %1421 = vst [vmem:[%s1417 + $0x18] sm:$0xe0] %v1412
        %1422 = vst [vmem:[%s1417 + $0x20] sm:$0x1] %v1409
        %1423 = vst [vmem:[%s1417 + $0x28] sm:$0x1] %v1410
        %1424 = vst [vmem:[%s1417 + $0x30] sm:$0x1] %v1411
        %1425 = vst [vmem:[%s1417 + $0x38] sm:$0x1] %v1412
        %s1426 = sadd.s32 %s174, 4
        %s1427 = sld [smem:[#allocation3 + %s1426]]
        %s1428 = smul.u32 %s1427, 4
        %s1429 = smul.addr %s1428, 4
        %s1430 = scalar_lea.vmem [#allocation4], %s1429
        %v1431 = vld [vmem:[%s1430] sm:$0xff]
        %v1432 = vld [vmem:[%s1430 + $0x8] sm:$0xff]
        %v1435 = vcombine.high %v1431, %v1431
        %v1436 = vcombine.high %v1432, %v1432
        %v1437 = vrot.slane %v1431, 3
        %v1438 = vrot.slane %v1435, 3
        %v1439 = vrot.slane %v1432, 3
        %v1440 = vrot.slane %v1436, 3
        %s1445 = scalar_lea.vmem %s172, 1280
        %1446 = vst [vmem:[%s1445] sm:$0xe0] %v1437
        %1447 = vst [vmem:[%s1445 + $0x8] sm:$0xe0] %v1438
        %1448 = vst [vmem:[%s1445 + $0x10] sm:$0xe0] %v1439
        %1449 = vst [vmem:[%s1445 + $0x18] sm:$0xe0] %v1440
        %1450 = vst [vmem:[%s1445 + $0x20] sm:$0x1] %v1437
        %1451 = vst [vmem:[%s1445 + $0x28] sm:$0x1] %v1438
        %1452 = vst [vmem:[%s1445 + $0x30] sm:$0x1] %v1439
        %1453 = vst [vmem:[%s1445 + $0x38] sm:$0x1] %v1440
        %s1454 = sadd.s32 %s174, 5
        %s1455 = sld [smem:[#allocation3 + %s1454]]
        %s1456 = smul.u32 %s1455, 4
        %s1457 = smul.addr %s1456, 4
        %s1458 = scalar_lea.vmem [#allocation4], %s1457
        %v1459 = vld [vmem:[%s1458] sm:$0xff]
        %v1460 = vld [vmem:[%s1458 + $0x8] sm:$0xff]
        %v1463 = vcombine.high %v1459, %v1459
        %v1464 = vcombine.high %v1460, %v1460
        %v1465 = vrot.slane %v1459, 3
        %v1466 = vrot.slane %v1463, 3
        %v1467 = vrot.slane %v1460, 3
        %v1468 = vrot.slane %v1464, 3
        %s1473 = scalar_lea.vmem %s172, 1600
        %1474 = vst [vmem:[%s1473] sm:$0xe0] %v1465
        %1475 = vst [vmem:[%s1473 + $0x8] sm:$0xe0] %v1466
        %1476 = vst [vmem:[%s1473 + $0x10] sm:$0xe0] %v1467
        %1477 = vst [vmem:[%s1473 + $0x18] sm:$0xe0] %v1468
        %1478 = vst [vmem:[%s1473 + $0x20] sm:$0x1] %v1465
        %1479 = vst [vmem:[%s1473 + $0x28] sm:$0x1] %v1466
        %1480 = vst [vmem:[%s1473 + $0x30] sm:$0x1] %v1467
        %1481 = vst [vmem:[%s1473 + $0x38] sm:$0x1] %v1468
        %s1482 = sadd.s32 %s174, 6
        %s1483 = sld [smem:[#allocation3 + %s1482]]
        %s1484 = smul.u32 %s1483, 4
        %s1485 = smul.addr %s1484, 4
        %s1486 = scalar_lea.vmem [#allocation4], %s1485
        %v1487 = vld [vmem:[%s1486] sm:$0xff]
        %v1488 = vld [vmem:[%s1486 + $0x8] sm:$0xff]
        %v1491 = vcombine.high %v1487, %v1487
        %v1492 = vcombine.high %v1488, %v1488
        %v1493 = vrot.slane %v1487, 3
        %v1494 = vrot.slane %v1491, 3
        %v1495 = vrot.slane %v1488, 3
        %v1496 = vrot.slane %v1492, 3
        %s1501 = scalar_lea.vmem %s172, 1920
        %1502 = vst [vmem:[%s1501] sm:$0xe0] %v1493
        %1503 = vst [vmem:[%s1501 + $0x8] sm:$0xe0] %v1494
        %1504 = vst [vmem:[%s1501 + $0x10] sm:$0xe0] %v1495
        %1505 = vst [vmem:[%s1501 + $0x18] sm:$0xe0] %v1496
        %1506 = vst [vmem:[%s1501 + $0x20] sm:$0x1] %v1493
        %1507 = vst [vmem:[%s1501 + $0x28] sm:$0x1] %v1494
        %1508 = vst [vmem:[%s1501 + $0x30] sm:$0x1] %v1495
        %1509 = vst [vmem:[%s1501 + $0x38] sm:$0x1] %v1496
        %s1510 = sadd.s32 %s174, 7
        %s1511 = sld [smem:[#allocation3 + %s1510]]
        %s1512 = smul.u32 %s1511, 4
        %s1513 = smul.addr %s1512, 4
        %s1514 = scalar_lea.vmem [#allocation4], %s1513
        %v1515 = vld [vmem:[%s1514] sm:$0xff]
        %v1516 = vld [vmem:[%s1514 + $0x8] sm:$0xff]
        %v1519 = vcombine.high %v1515, %v1515
        %v1520 = vcombine.high %v1516, %v1516
        %v1521 = vrot.slane %v1515, 3
        %v1522 = vrot.slane %v1519, 3
        %v1523 = vrot.slane %v1516, 3
        %v1524 = vrot.slane %v1520, 3
        %s1529 = scalar_lea.vmem %s172, 2240
        %1530 = vst [vmem:[%s1529] sm:$0xe0] %v1521
        %1531 = vst [vmem:[%s1529 + $0x8] sm:$0xe0] %v1522
        %1532 = vst [vmem:[%s1529 + $0x10] sm:$0xe0] %v1523
        %1533 = vst [vmem:[%s1529 + $0x18] sm:$0xe0] %v1524
        %1534 = vst [vmem:[%s1529 + $0x20] sm:$0x1] %v1521
        %1535 = vst [vmem:[%s1529 + $0x28] sm:$0x1] %v1522
        %1536 = vst [vmem:[%s1529 + $0x30] sm:$0x1] %v1523
        %1537 = vst [vmem:[%s1529 + $0x38] sm:$0x1] %v1524
        %s1538 = sadd.s32 %s174, 8
        %s1539 = sld [smem:[#allocation3 + %s1538]]
        %s1540 = smul.u32 %s1539, 4
        %s1541 = smul.addr %s1540, 4
        %s1542 = scalar_lea.vmem [#allocation4], %s1541
        %v1543 = vld [vmem:[%s1542] sm:$0xff]
        %v1544 = vld [vmem:[%s1542 + $0x8] sm:$0xff]
        %v1547 = vcombine.high %v1543, %v1543
        %v1548 = vcombine.high %v1544, %v1544
        %v1549 = vrot.slane %v1543, 3
        %v1550 = vrot.slane %v1547, 3
        %v1551 = vrot.slane %v1544, 3
        %v1552 = vrot.slane %v1548, 3
        %s1557 = scalar_lea.vmem %s172, 2560
        %1558 = vst [vmem:[%s1557] sm:$0xe0] %v1549
        %1559 = vst [vmem:[%s1557 + $0x8] sm:$0xe0] %v1550
        %1560 = vst [vmem:[%s1557 + $0x10] sm:$0xe0] %v1551
        %1561 = vst [vmem:[%s1557 + $0x18] sm:$0xe0] %v1552
        %1562 = vst [vmem:[%s1557 + $0x20] sm:$0x1] %v1549
        %1563 = vst [vmem:[%s1557 + $0x28] sm:$0x1] %v1550
        %1564 = vst [vmem:[%s1557 + $0x30] sm:$0x1] %v1551
        %1565 = vst [vmem:[%s1557 + $0x38] sm:$0x1] %v1552
        %s1566 = sadd.s32 %s174, 9
        %s1567 = sld [smem:[#allocation3 + %s1566]]
        %s1568 = smul.u32 %s1567, 4
        %s1569 = smul.addr %s1568, 4
        %s1570 = scalar_lea.vmem [#allocation4], %s1569
        %v1571 = vld [vmem:[%s1570] sm:$0xff]
        %v1572 = vld [vmem:[%s1570 + $0x8] sm:$0xff]
        %v1575 = vcombine.high %v1571, %v1571
        %v1576 = vcombine.high %v1572, %v1572
        %v1577 = vrot.slane %v1571, 3
        %v1578 = vrot.slane %v1575, 3
        %v1579 = vrot.slane %v1572, 3
        %v1580 = vrot.slane %v1576, 3
        %s1585 = scalar_lea.vmem %s172, 2880
        %1586 = vst [vmem:[%s1585] sm:$0xe0] %v1577
        %1587 = vst [vmem:[%s1585 + $0x8] sm:$0xe0] %v1578
        %1588 = vst [vmem:[%s1585 + $0x10] sm:$0xe0] %v1579
        %1589 = vst [vmem:[%s1585 + $0x18] sm:$0xe0] %v1580
        %1590 = vst [vmem:[%s1585 + $0x20] sm:$0x1] %v1577
        %1591 = vst [vmem:[%s1585 + $0x28] sm:$0x1] %v1578
        %1592 = vst [vmem:[%s1585 + $0x30] sm:$0x1] %v1579
        %1593 = vst [vmem:[%s1585 + $0x38] sm:$0x1] %v1580
        %s1594 = sadd.s32 %s174, 10
        %s1595 = sld [smem:[#allocation3 + %s1594]]
        %s1596 = smul.u32 %s1595, 4
        %s1597 = smul.addr %s1596, 4
        %s1598 = scalar_lea.vmem [#allocation4], %s1597
        %v1599 = vld [vmem:[%s1598] sm:$0xff]
        %v1600 = vld [vmem:[%s1598 + $0x8] sm:$0xff]
        %v1603 = vcombine.high %v1599, %v1599
        %v1604 = vcombine.high %v1600, %v1600
        %v1605 = vrot.slane %v1599, 3
        %v1606 = vrot.slane %v1603, 3
        %v1607 = vrot.slane %v1600, 3
        %v1608 = vrot.slane %v1604, 3
        %s1613 = scalar_lea.vmem %s172, 3200
        %1614 = vst [vmem:[%s1613] sm:$0xe0] %v1605
        %1615 = vst [vmem:[%s1613 + $0x8] sm:$0xe0] %v1606
        %1616 = vst [vmem:[%s1613 + $0x10] sm:$0xe0] %v1607
        %1617 = vst [vmem:[%s1613 + $0x18] sm:$0xe0] %v1608
        %1618 = vst [vmem:[%s1613 + $0x20] sm:$0x1] %v1605
        %1619 = vst [vmem:[%s1613 + $0x28] sm:$0x1] %v1606
        %1620 = vst [vmem:[%s1613 + $0x30] sm:$0x1] %v1607
        %1621 = vst [vmem:[%s1613 + $0x38] sm:$0x1] %v1608
        %s1622 = sadd.s32 %s174, 11
        %s1623 = sld [smem:[#allocation3 + %s1622]]
        %s1624 = smul.u32 %s1623, 4
        %s1625 = smul.addr %s1624, 4
        %s1626 = scalar_lea.vmem [#allocation4], %s1625
        %v1627 = vld [vmem:[%s1626] sm:$0xff]
        %v1628 = vld [vmem:[%s1626 + $0x8] sm:$0xff]
        %v1631 = vcombine.high %v1627, %v1627
        %v1632 = vcombine.high %v1628, %v1628
        %v1633 = vrot.slane %v1627, 3
        %v1634 = vrot.slane %v1631, 3
        %v1635 = vrot.slane %v1628, 3
        %v1636 = vrot.slane %v1632, 3
        %s1641 = scalar_lea.vmem %s172, 3520
        %1642 = vst [vmem:[%s1641] sm:$0xe0] %v1633
        %1643 = vst [vmem:[%s1641 + $0x8] sm:$0xe0] %v1634
        %1644 = vst [vmem:[%s1641 + $0x10] sm:$0xe0] %v1635
        %1645 = vst [vmem:[%s1641 + $0x18] sm:$0xe0] %v1636
        %1646 = vst [vmem:[%s1641 + $0x20] sm:$0x1] %v1633
        %1647 = vst [vmem:[%s1641 + $0x28] sm:$0x1] %v1634
        %1648 = vst [vmem:[%s1641 + $0x30] sm:$0x1] %v1635
        %1649 = vst [vmem:[%s1641 + $0x38] sm:$0x1] %v1636
        %s1650 = sadd.s32 %s174, 12
        %s1651 = sld [smem:[#allocation3 + %s1650]]
        %s1652 = smul.u32 %s1651, 4
        %s1653 = smul.addr %s1652, 4
        %s1654 = scalar_lea.vmem [#allocation4], %s1653
        %v1655 = vld [vmem:[%s1654] sm:$0xff]
        %v1656 = vld [vmem:[%s1654 + $0x8] sm:$0xff]
        %v1659 = vcombine.high %v1655, %v1655
        %v1660 = vcombine.high %v1656, %v1656
        %v1661 = vrot.slane %v1655, 3
        %v1662 = vrot.slane %v1659, 3
        %v1663 = vrot.slane %v1656, 3
        %v1664 = vrot.slane %v1660, 3
        %s1669 = scalar_lea.vmem %s172, 3840
        %1670 = vst [vmem:[%s1669] sm:$0xe0] %v1661
        %1671 = vst [vmem:[%s1669 + $0x8] sm:$0xe0] %v1662
        %1672 = vst [vmem:[%s1669 + $0x10] sm:$0xe0] %v1663
        %1673 = vst [vmem:[%s1669 + $0x18] sm:$0xe0] %v1664
        %1674 = vst [vmem:[%s1669 + $0x20] sm:$0x1] %v1661
        %1675 = vst [vmem:[%s1669 + $0x28] sm:$0x1] %v1662
        %1676 = vst [vmem:[%s1669 + $0x30] sm:$0x1] %v1663
        %1677 = vst [vmem:[%s1669 + $0x38] sm:$0x1] %v1664
        %s1678 = sadd.s32 %s174, 13
        %s1679 = sld [smem:[#allocation3 + %s1678]]
        %s1680 = smul.u32 %s1679, 4
        %s1681 = smul.addr %s1680, 4
        %s1682 = scalar_lea.vmem [#allocation4], %s1681
        %v1683 = vld [vmem:[%s1682] sm:$0xff]
        %v1684 = vld [vmem:[%s1682 + $0x8] sm:$0xff]
        %v1687 = vcombine.high %v1683, %v1683
        %v1688 = vcombine.high %v1684, %v1684
        %v1689 = vrot.slane %v1683, 3
        %v1690 = vrot.slane %v1687, 3
        %v1691 = vrot.slane %v1684, 3
        %v1692 = vrot.slane %v1688, 3
        %s1697 = scalar_lea.vmem %s172, 4160
        %1698 = vst [vmem:[%s1697] sm:$0xe0] %v1689
        %1699 = vst [vmem:[%s1697 + $0x8] sm:$0xe0] %v1690
        %1700 = vst [vmem:[%s1697 + $0x10] sm:$0xe0] %v1691
        %1701 = vst [vmem:[%s1697 + $0x18] sm:$0xe0] %v1692
        %1702 = vst [vmem:[%s1697 + $0x20] sm:$0x1] %v1689
        %1703 = vst [vmem:[%s1697 + $0x28] sm:$0x1] %v1690
        %1704 = vst [vmem:[%s1697 + $0x30] sm:$0x1] %v1691
        %1705 = vst [vmem:[%s1697 + $0x38] sm:$0x1] %v1692
        %s1706 = sadd.s32 %s174, 14
        %s1707 = sld [smem:[#allocation3 + %s1706]]
        %s1708 = smul.u32 %s1707, 4
        %s1709 = smul.addr %s1708, 4
        %s1710 = scalar_lea.vmem [#allocation4], %s1709
        %v1711 = vld [vmem:[%s1710] sm:$0xff]
        %v1712 = vld [vmem:[%s1710 + $0x8] sm:$0xff]
        %v1715 = vcombine.high %v1711, %v1711
        %v1716 = vcombine.high %v1712, %v1712
        %v1717 = vrot.slane %v1711, 3
        %v1718 = vrot.slane %v1715, 3
        %v1719 = vrot.slane %v1712, 3
        %v1720 = vrot.slane %v1716, 3
        %s1725 = scalar_lea.vmem %s172, 4480
        %1726 = vst [vmem:[%s1725] sm:$0xe0] %v1717
        %1727 = vst [vmem:[%s1725 + $0x8] sm:$0xe0] %v1718
        %1728 = vst [vmem:[%s1725 + $0x10] sm:$0xe0] %v1719
        %1729 = vst [vmem:[%s1725 + $0x18] sm:$0xe0] %v1720
        %1730 = vst [vmem:[%s1725 + $0x20] sm:$0x1] %v1717
        %1731 = vst [vmem:[%s1725 + $0x28] sm:$0x1] %v1718
        %1732 = vst [vmem:[%s1725 + $0x30] sm:$0x1] %v1719
        %1733 = vst [vmem:[%s1725 + $0x38] sm:$0x1] %v1720
        %s1734 = sadd.s32 %s174, 15
        %s1735 = sld [smem:[#allocation3 + %s1734]]
        %s1736 = smul.u32 %s1735, 4
        %s1737 = smul.addr %s1736, 4
        %s1738 = scalar_lea.vmem [#allocation4], %s1737
        %v1739 = vld [vmem:[%s1738] sm:$0xff]
        %v1740 = vld [vmem:[%s1738 + $0x8] sm:$0xff]
        %v1743 = vcombine.high %v1739, %v1739
        %v1744 = vcombine.high %v1740, %v1740
        %v1745 = vrot.slane %v1739, 3
        %v1746 = vrot.slane %v1743, 3
        %v1747 = vrot.slane %v1740, 3
        %v1748 = vrot.slane %v1744, 3
        %s1753 = scalar_lea.vmem %s172, 4800
        %1754 = vst [vmem:[%s1753] sm:$0xe0] %v1745
        %1755 = vst [vmem:[%s1753 + $0x8] sm:$0xe0] %v1746
        %1756 = vst [vmem:[%s1753 + $0x10] sm:$0xe0] %v1747
        %1757 = vst [vmem:[%s1753 + $0x18] sm:$0xe0] %v1748
        %1758 = vst [vmem:[%s1753 + $0x20] sm:$0x1] %v1745
        %1759 = vst [vmem:[%s1753 + $0x28] sm:$0x1] %v1746
        %1760 = vst [vmem:[%s1753 + $0x30] sm:$0x1] %v1747
        %1761 = vst [vmem:[%s1753 + $0x38] sm:$0x1] %v1748
        %s1762 = sadd.s32 %s174, 16
        %s1763 = sld [smem:[#allocation3 + %s1762]]
        %s1764 = smul.u32 %s1763, 4
        %s1765 = smul.addr %s1764, 4
        %s1766 = scalar_lea.vmem [#allocation4], %s1765
        %v1767 = vld [vmem:[%s1766] sm:$0xff]
        %v1768 = vld [vmem:[%s1766 + $0x8] sm:$0xff]
        %v1771 = vcombine.high %v1767, %v1767
        %v1772 = vcombine.high %v1768, %v1768
        %v1773 = vrot.slane %v1767, 3
        %v1774 = vrot.slane %v1771, 3
        %v1775 = vrot.slane %v1768, 3
        %v1776 = vrot.slane %v1772, 3
        %s1781 = scalar_lea.vmem %s172, 5120
        %1782 = vst [vmem:[%s1781] sm:$0xe0] %v1773
        %1783 = vst [vmem:[%s1781 + $0x8] sm:$0xe0] %v1774
        %1784 = vst [vmem:[%s1781 + $0x10] sm:$0xe0] %v1775
        %1785 = vst [vmem:[%s1781 + $0x18] sm:$0xe0] %v1776
        %1786 = vst [vmem:[%s1781 + $0x20] sm:$0x1] %v1773
        %1787 = vst [vmem:[%s1781 + $0x28] sm:$0x1] %v1774
        %1788 = vst [vmem:[%s1781 + $0x30] sm:$0x1] %v1775
        %1789 = vst [vmem:[%s1781 + $0x38] sm:$0x1] %v1776
        %s1790 = sadd.s32 %s174, 17
        %s1791 = sld [smem:[#allocation3 + %s1790]]
        %s1792 = smul.u32 %s1791, 4
        %s1793 = smul.addr %s1792, 4
        %s1794 = scalar_lea.vmem [#allocation4], %s1793
        %v1795 = vld [vmem:[%s1794] sm:$0xff]
        %v1796 = vld [vmem:[%s1794 + $0x8] sm:$0xff]
        %v1799 = vcombine.high %v1795, %v1795
        %v1800 = vcombine.high %v1796, %v1796
        %v1801 = vrot.slane %v1795, 3
        %v1802 = vrot.slane %v1799, 3
        %v1803 = vrot.slane %v1796, 3
        %v1804 = vrot.slane %v1800, 3
        %s1809 = scalar_lea.vmem %s172, 5440
        %1810 = vst [vmem:[%s1809] sm:$0xe0] %v1801
        %1811 = vst [vmem:[%s1809 + $0x8] sm:$0xe0] %v1802
        %1812 = vst [vmem:[%s1809 + $0x10] sm:$0xe0] %v1803
        %1813 = vst [vmem:[%s1809 + $0x18] sm:$0xe0] %v1804
        %1814 = vst [vmem:[%s1809 + $0x20] sm:$0x1] %v1801
        %1815 = vst [vmem:[%s1809 + $0x28] sm:$0x1] %v1802
        %1816 = vst [vmem:[%s1809 + $0x30] sm:$0x1] %v1803
        %1817 = vst [vmem:[%s1809 + $0x38] sm:$0x1] %v1804
        %s1818 = sadd.s32 %s174, 18
        %s1819 = sld [smem:[#allocation3 + %s1818]]
        %s1820 = smul.u32 %s1819, 4
        %s1821 = smul.addr %s1820, 4
        %s1822 = scalar_lea.vmem [#allocation4], %s1821
        %v1823 = vld [vmem:[%s1822] sm:$0xff]
        %v1824 = vld [vmem:[%s1822 + $0x8] sm:$0xff]
        %v1827 = vcombine.high %v1823, %v1823
        %v1828 = vcombine.high %v1824, %v1824
        %v1829 = vrot.slane %v1823, 3
        %v1830 = vrot.slane %v1827, 3
        %v1831 = vrot.slane %v1824, 3
        %v1832 = vrot.slane %v1828, 3
        %s1837 = scalar_lea.vmem %s172, 5760
        %1838 = vst [vmem:[%s1837] sm:$0xe0] %v1829
        %1839 = vst [vmem:[%s1837 + $0x8] sm:$0xe0] %v1830
        %1840 = vst [vmem:[%s1837 + $0x10] sm:$0xe0] %v1831
        %1841 = vst [vmem:[%s1837 + $0x18] sm:$0xe0] %v1832
        %1842 = vst [vmem:[%s1837 + $0x20] sm:$0x1] %v1829
        %1843 = vst [vmem:[%s1837 + $0x28] sm:$0x1] %v1830
        %1844 = vst [vmem:[%s1837 + $0x30] sm:$0x1] %v1831
        %1845 = vst [vmem:[%s1837 + $0x38] sm:$0x1] %v1832
        %s1846 = sadd.s32 %s174, 19
        %s1847 = sld [smem:[#allocation3 + %s1846]]
        %s1848 = smul.u32 %s1847, 4
        %s1849 = smul.addr %s1848, 4
        %s1850 = scalar_lea.vmem [#allocation4], %s1849
        %v1851 = vld [vmem:[%s1850] sm:$0xff]
        %v1852 = vld [vmem:[%s1850 + $0x8] sm:$0xff]
        %v1855 = vcombine.high %v1851, %v1851
        %v1856 = vcombine.high %v1852, %v1852
        %v1857 = vrot.slane %v1851, 3
        %v1858 = vrot.slane %v1855, 3
        %v1859 = vrot.slane %v1852, 3
        %v1860 = vrot.slane %v1856, 3
        %s1865 = scalar_lea.vmem %s172, 6080
        %1866 = vst [vmem:[%s1865] sm:$0xe0] %v1857
        %1867 = vst [vmem:[%s1865 + $0x8] sm:$0xe0] %v1858
        %1868 = vst [vmem:[%s1865 + $0x10] sm:$0xe0] %v1859
        %1869 = vst [vmem:[%s1865 + $0x18] sm:$0xe0] %v1860
        %1870 = vst [vmem:[%s1865 + $0x20] sm:$0x1] %v1857
        %1871 = vst [vmem:[%s1865 + $0x28] sm:$0x1] %v1858
        %1872 = vst [vmem:[%s1865 + $0x30] sm:$0x1] %v1859
        %1873 = vst [vmem:[%s1865 + $0x38] sm:$0x1] %v1860
        %s1874 = sadd.s32 %s174, 20
        %s1875 = sld [smem:[#allocation3 + %s1874]]
        %s1876 = smul.u32 %s1875, 4
        %s1877 = smul.addr %s1876, 4
        %s1878 = scalar_lea.vmem [#allocation4], %s1877
        %v1879 = vld [vmem:[%s1878] sm:$0xff]
        %v1880 = vld [vmem:[%s1878 + $0x8] sm:$0xff]
        %v1883 = vcombine.high %v1879, %v1879
        %v1884 = vcombine.high %v1880, %v1880
        %v1885 = vrot.slane %v1879, 3
        %v1886 = vrot.slane %v1883, 3
        %v1887 = vrot.slane %v1880, 3
        %v1888 = vrot.slane %v1884, 3
        %s1893 = scalar_lea.vmem %s172, 6400
        %1894 = vst [vmem:[%s1893] sm:$0xe0] %v1885
        %1895 = vst [vmem:[%s1893 + $0x8] sm:$0xe0] %v1886
        %1896 = vst [vmem:[%s1893 + $0x10] sm:$0xe0] %v1887
        %1897 = vst [vmem:[%s1893 + $0x18] sm:$0xe0] %v1888
        %1898 = vst [vmem:[%s1893 + $0x20] sm:$0x1] %v1885
        %1899 = vst [vmem:[%s1893 + $0x28] sm:$0x1] %v1886
        %1900 = vst [vmem:[%s1893 + $0x30] sm:$0x1] %v1887
        %1901 = vst [vmem:[%s1893 + $0x38] sm:$0x1] %v1888
        %s1902 = sadd.s32 %s174, 21
        %s1903 = sld [smem:[#allocation3 + %s1902]]
        %s1904 = smul.u32 %s1903, 4
        %s1905 = smul.addr %s1904, 4
        %s1906 = scalar_lea.vmem [#allocation4], %s1905
        %v1907 = vld [vmem:[%s1906] sm:$0xff]
        %v1908 = vld [vmem:[%s1906 + $0x8] sm:$0xff]
        %v1911 = vcombine.high %v1907, %v1907
        %v1912 = vcombine.high %v1908, %v1908
        %v1913 = vrot.slane %v1907, 3
        %v1914 = vrot.slane %v1911, 3
        %v1915 = vrot.slane %v1908, 3
        %v1916 = vrot.slane %v1912, 3
        %s1921 = scalar_lea.vmem %s172, 6720
        %1922 = vst [vmem:[%s1921] sm:$0xe0] %v1913
        %1923 = vst [vmem:[%s1921 + $0x8] sm:$0xe0] %v1914
        %1924 = vst [vmem:[%s1921 + $0x10] sm:$0xe0] %v1915
        %1925 = vst [vmem:[%s1921 + $0x18] sm:$0xe0] %v1916
        %1926 = vst [vmem:[%s1921 + $0x20] sm:$0x1] %v1913
        %1927 = vst [vmem:[%s1921 + $0x28] sm:$0x1] %v1914
        %1928 = vst [vmem:[%s1921 + $0x30] sm:$0x1] %v1915
        %1929 = vst [vmem:[%s1921 + $0x38] sm:$0x1] %v1916
        %s1930 = sadd.s32 %s174, 22
        %s1931 = sld [smem:[#allocation3 + %s1930]]
        %s1932 = smul.u32 %s1931, 4
        %s1933 = smul.addr %s1932, 4
        %s1934 = scalar_lea.vmem [#allocation4], %s1933
        %v1935 = vld [vmem:[%s1934] sm:$0xff]
        %v1936 = vld [vmem:[%s1934 + $0x8] sm:$0xff]
        %v1939 = vcombine.high %v1935, %v1935
        %v1940 = vcombine.high %v1936, %v1936
        %v1941 = vrot.slane %v1935, 3
        %v1942 = vrot.slane %v1939, 3
        %v1943 = vrot.slane %v1936, 3
        %v1944 = vrot.slane %v1940, 3
        %s1949 = scalar_lea.vmem %s172, 7040
        %1950 = vst [vmem:[%s1949] sm:$0xe0] %v1941
        %1951 = vst [vmem:[%s1949 + $0x8] sm:$0xe0] %v1942
        %1952 = vst [vmem:[%s1949 + $0x10] sm:$0xe0] %v1943
        %1953 = vst [vmem:[%s1949 + $0x18] sm:$0xe0] %v1944
        %1954 = vst [vmem:[%s1949 + $0x20] sm:$0x1] %v1941
        %1955 = vst [vmem:[%s1949 + $0x28] sm:$0x1] %v1942
        %1956 = vst [vmem:[%s1949 + $0x30] sm:$0x1] %v1943
        %1957 = vst [vmem:[%s1949 + $0x38] sm:$0x1] %v1944
        %s1958 = sadd.s32 %s174, 23
        %s1959 = sld [smem:[#allocation3 + %s1958]]
        %s1960 = smul.u32 %s1959, 4
        %s1961 = smul.addr %s1960, 4
        %s1962 = scalar_lea.vmem [#allocation4], %s1961
        %v1963 = vld [vmem:[%s1962] sm:$0xff]
        %v1964 = vld [vmem:[%s1962 + $0x8] sm:$0xff]
        %v1967 = vcombine.high %v1963, %v1963
        %v1968 = vcombine.high %v1964, %v1964
        %v1969 = vrot.slane %v1963, 3
        %v1970 = vrot.slane %v1967, 3
        %v1971 = vrot.slane %v1964, 3
        %v1972 = vrot.slane %v1968, 3
        %s1977 = scalar_lea.vmem %s172, 7360
        %1978 = vst [vmem:[%s1977] sm:$0xe0] %v1969
        %1979 = vst [vmem:[%s1977 + $0x8] sm:$0xe0] %v1970
        %1980 = vst [vmem:[%s1977 + $0x10] sm:$0xe0] %v1971
        %1981 = vst [vmem:[%s1977 + $0x18] sm:$0xe0] %v1972
        %1982 = vst [vmem:[%s1977 + $0x20] sm:$0x1] %v1969
        %1983 = vst [vmem:[%s1977 + $0x28] sm:$0x1] %v1970
        %1984 = vst [vmem:[%s1977 + $0x30] sm:$0x1] %v1971
        %1985 = vst [vmem:[%s1977 + $0x38] sm:$0x1] %v1972
        %s1986 = smul.u32 24, %s20
        %p1987 = scmp.lt.s32.totalorder %s1986, 47
        %s1988 = scalar_select %p1987, %s1986, 47
        %s1989 = smul.addr %s1988, 40
        %s1990 = smul.addr %s1989, 8
        %s1991 = scalar_lea.vmem %s4, %s1990
        // Predicated region
        $region37: #{tpu_custom_call.1} parent=31 // pred_check
          %p1992 = pneg %p101
        $region38: #{tpu_custom_call.1} parent=31 // pred_check_branch
          %1994 = sbr.rel (%p1992) target = $region40
        $region39: #{tpu_custom_call.1} parent=31 // pred_region
          %s1995 = smul.u32 24, %s20
        $region40: #{tpu_custom_call.1} parent=31 // pred_fallthru
          _
      $region32: #{tpu_custom_call.1} parent=5 // pred_fallthru
        _
      %p1996 = scmp.le.s32.totalorder 2, %s15
      // Predicated region
      $region41: #{tpu_custom_call.1} parent=5 // pred_check
        %p1997 = pneg %p1996
      $region42: #{tpu_custom_call.1} parent=5 // pred_check_branch
        %1999 = sbr.rel (%p1997) target = $region44
      $region43: #{tpu_custom_call.1} parent=5 // pred_region
        %s2000 = ssub.s32 %s15, 2
        // Predicated region
        $region45: #{tpu_custom_call.1} parent=43 // pred_check
          %p2001 = pneg %p107
        $region46: #{tpu_custom_call.1} parent=43 // pred_check_branch
          %2003 = sbr.rel (%p2001) target = $region48
        $region47: #{tpu_custom_call.1} parent=43 // pred_region
          %s2004 = smul.u32 24, %s21
          %p2005 = scmp.lt.s32.totalorder %s2004, 47
          %s2006 = scalar_select %p2005, %s2004, 47
          %s2007 = smul.addr %s2006, 40
          %s2008 = smul.addr %s2007, 8
          %s2009 = scalar_lea.vmem %s4, %s2008
        $region48: #{tpu_custom_call.1} parent=43 // pred_fallthru
          _
      $region44: #{tpu_custom_call.1} parent=5 // pred_fallthru
        _
    $region6: #{tpu_custom_call.1} parent=1 // loop_footer
      %s19 = sadd.s32 1, %s15
    $region7: #{tpu_custom_call.1} parent=1 // loop_footer_branch
      %14 = sbr.rel target = $region3
    $region8: #{tpu_custom_call.1} parent=1 // loop_exit
      _
    %2010 = vsyncpa [#allocation5], 1
    %s2011 = scalar_lea.sflag [#allocation5], 1
    %2012 = vsyncpa %s2011, 1

</llo_original>
